<compile_context>
chip_gen: v7x
topology: tpu7x:2x2x1
jax: 0.10.0
libtpu: 0.0.40
codegen_flags: <defaults>
</compile_context>

<pallas_src>
import jax
import jax.numpy as jnp
from jax import lax
from jax.experimental import pallas as pl
from jax.experimental.pallas import tpu as pltpu

H = 32          # hidden_layer_size
L = 2           # num_layers
IN = 1          # input_size
OUT = 1         # output_size
BP = 8          # padded batch = one sublane tile

# packed weight buffer row layout (width 8*H = 256 lanes)
_R_WFUSED = 0            # rows 0      : 2H   -> fused per-step RHS (2H, 8H)
_R_WIH0 = 2 * H          # rows 2H     : 3H   -> wih0 (H, 4H)
_R_BG0 = 3 * H           # row  3H            -> bg0 (4H,)
_R_BG1 = 3 * H + 1       # row  3H+1          -> bg1 (4H,)
_R_W1 = 3 * H + 2        # row  3H+2          -> linear_1 weight (H,)
_R_B1 = 3 * H + 3        # row  3H+3          -> linear_1 bias (H,)
_R_W2 = 3 * H + 4        # row  3H+4          -> linear_2 weight (2H,)
_R_B2 = 3 * H + 5        # row  3H+5          -> linear_2 bias (1,)
_R_TOT = 104             # padded to a multiple of 8 sublanes


def lstm_model_kernel(x_ref, wp_ref, out_ref):
    S = x_ref.shape[0] // BP

    # ---- unpack the single packed weight buffer (static, aligned slices) ----
    w_fused = wp_ref[0:2 * H, :]                      # (2H, 8H)
    wih0 = wp_ref[_R_WIH0:_R_WIH0 + H, 0:4 * H]       # (H, 4H)
    bg0 = wp_ref[_R_BG0:_R_BG0 + 1, 0:4 * H]          # (1, 4H)
    bg1 = wp_ref[_R_BG1:_R_BG1 + 1, 0:4 * H]          # (1, 4H)
    w1 = wp_ref[_R_W1:_R_W1 + 1, 0:H]                 # (1, H)
    b1 = wp_ref[_R_B1:_R_B1 + 1, 0:H]                 # (1, H)
    w2 = wp_ref[_R_W2:_R_W2 + 1, 0:2 * H]             # (1, 2H)
    b2 = wp_ref[_R_B2:_R_B2 + 1, 0:1]                 # (1, 1)

    # ---- prologue (off the recurrence critical path) ------------------------
    # linear_1 + ReLU (input_size == 1 -> broadcasted scale + bias)
    xh = jnp.maximum(x_ref[...] * w1 + b1, 0.0)                        # (S*BP, H)
    # hoisted layer-0 input projection, bias folded in (gate columns pre-scaled)
    g0_all = (jnp.dot(xh, wih0, preferred_element_type=jnp.float32)
              + bg0)                                                   # (S*BP, 4H)

    # single-tanh gate activation: i/f/o pre-activations arrive pre-scaled by
    # 0.5, so sigmoid(x) = 0.5*tanh(x/2) + 0.5; g (cell) lanes use tanh directly
    lane = lax.broadcasted_iota(jnp.int32, (BP, 4 * H), 1)
    g_lanes = (lane >= 2 * H) & (lane < 3 * H)

    def cell(pre, c):
        t = jnp.tanh(pre)                                  # 1 full-vreg EUP op
        act = jnp.where(g_lanes, t, 0.5 * t + 0.5)         # [σi | σf | tg | σo]
        i = act[:, 0:H]
        f = act[:, H:2 * H]
        g = act[:, 2 * H:3 * H]
        o = act[:, 3 * H:4 * H]
        c_new = f * c + i * g
        h_new = o * jnp.tanh(c_new)
        return h_new, c_new

    zeros = jnp.zeros((BP, H), jnp.float32)

    # step 0, layer 0: recurrent term is zero (h0(-1) = 0)
    h0, c0 = cell(g0_all[0:BP, :], zeros)
    h1, c1 = zeros, zeros
    hpack = jnp.concatenate([h0, h1], axis=-1)             # (BP, 2H) = [h0(t) | h1(t-1)]

    # ---- software-pipelined fused recurrence (fully unrolled, S static) -----
    # one matmul per step: cols 0:4H -> layer-1 gates step t,
    #                      cols 4H:8H -> layer-0 recurrent gates step t+1
    for t in range(S):
        gg = jnp.dot(hpack, w_fused, preferred_element_type=jnp.float32)  # (BP, 8H)
        h1, c1 = cell(gg[:, 0:4 * H] + bg1, c1)                           # layer 1, step t
        if t + 1 < S:
            pre0 = gg[:, 4 * H:8 * H] + g0_all[(t + 1) * BP:(t + 2) * BP, :]
            h0, c0 = cell(pre0, c0)                                       # layer 0, step t+1
            hpack = jnp.concatenate([h0, h1], axis=-1)

    # ---- epilogue: h_n.permute(1,0,2).reshape(B, L*H) == [h0 | h1]; dropout is
    # identity in inference; linear_2 as VPU multiply + lane reduction.
    # TODO(synk): training-mode dropout (random mask + 1/(1-p) scaling) not implemented.
    feat = jnp.concatenate([h0, h1], axis=-1)                             # (BP, 2H)
    out_ref[...] = jnp.sum(feat * w2, axis=-1, keepdims=True) + b2


def lstm_model_forward(x, p):
    B, S, _ = x.shape
    assert IN == 1, "linear_1 is implemented as a broadcast; IN > 1 needs a matmul"
    # TODO(synk): for B > 8 add a leading batch-block grid axis with
    # dimension_semantics=("parallel", ...) to engage both v7x TensorCores.
    assert B <= BP

    # time-major flatten, batch zero-padded to one sublane tile (8 rows)
    x_t = jnp.transpose(x, (1, 0, 2)).astype(jnp.float32)         # (S, B, IN)
    x_t = jnp.pad(x_t, ((0, 0), (0, BP - B), (0, 0)))
    x_flat = x_t.reshape(S * BP, IN)

    # pre-scale i/f/o gate columns by 0.5 (sigmoid(x) = 0.5*tanh(x/2) + 0.5 trick)
    scale = jnp.concatenate([jnp.full((2 * H,), 0.5, jnp.float32),
                             jnp.ones((H,), jnp.float32),
                             jnp.full((H,), 0.5, jnp.float32)])    # (4H,)
    wih0_s = p['wih0'] * scale
    whh0_s = p['whh0'] * scale
    bg0_s = p['bg0'] * scale
    wih1_s = p['wih1'] * scale
    whh1_s = p['whh1'] * scale
    bg1_s = p['bg1'] * scale

    # fused per-step RHS (2H, 8H): cols 0:4H layer-1 gates (rows 0:H from h0,
    # H:2H from h1); cols 4H:8H layer-0 recurrent gates (rows H:2H zeroed)
    w_fused = jnp.zeros((2 * H, 8 * H), jnp.float32)
    w_fused = w_fused.at[0:H, 0:4 * H].set(wih1_s)
    w_fused = w_fused.at[H:2 * H, 0:4 * H].set(whh1_s)
    w_fused = w_fused.at[0:H, 4 * H:8 * H].set(whh0_s)

    # pack all weights/biases into ONE buffer -> a single weight DMA.
    # NOTE: bg0/bg1 are b_ih + b_hh pre-summed (both zero-init here); when
    # importing real PyTorch weights, sum them before packing.
    wpack = jnp.zeros((_R_TOT, 8 * H), jnp.float32)
    wpack = wpack.at[0:2 * H, :].set(w_fused)
    wpack = wpack.at[_R_WIH0:_R_WIH0 + H, 0:4 * H].set(wih0_s)
    wpack = wpack.at[_R_BG0, 0:4 * H].set(bg0_s[0])
    wpack = wpack.at[_R_BG1, 0:4 * H].set(bg1_s[0])
    wpack = wpack.at[_R_W1, 0:H].set(p['w1'][0])
    wpack = wpack.at[_R_B1, 0:H].set(p['b1'][0])
    wpack = wpack.at[_R_W2, 0:2 * H].set(p['w2'][:, 0])
    wpack = wpack.at[_R_B2, 0:1].set(p['b2'][0])

    # TODO(synk): optional bf16 cast of the matmul operands (keep f32 accum /
    # cell math) would cut per-step MXU latency further but loosens tolerances.
    vmem = pl.BlockSpec(memory_space=pltpu.MemorySpace.VMEM)
    out = pl.pallas_call(
        lstm_model_kernel,
        out_shape=jax.ShapeDtypeStruct((BP, OUT), jnp.float32),
        in_specs=[vmem, vmem],
        out_specs=vmem,
    )(x_flat, wpack)
    return out[:B]


# ---------------- deterministic parameter init (mirrors module __init__) ----
def init_params(key):
    ks = jax.random.split(key, 8)

    def kaiming_t(k, torch_shape):          # weight_ih: kaiming normal, pass transposed
        fan_in = torch_shape[1]
        std = (2.0 / fan_in) ** 0.5
        return (jax.random.normal(k, torch_shape, jnp.float32) * std).T

    def orthogonal_t(k, torch_shape):       # weight_hh: (semi-)orthogonal, pass transposed
        a = jax.random.normal(k, torch_shape, jnp.float32)
        q, r = jnp.linalg.qr(a)
        q = q * jnp.sign(jnp.diagonal(r))[None, :]
        return q.T

    b1_bound = 1.0 / (IN ** 0.5)
    b2_bound = 1.0 / ((L * H) ** 0.5)
    return {
        'w1': jax.random.uniform(ks[0], (IN, H), jnp.float32, -b1_bound, b1_bound),
        'b1': jax.random.uniform(ks[1], (1, H), jnp.float32, -b1_bound, b1_bound),
        'wih0': kaiming_t(ks[2], (4 * H, H)),
        'whh0': orthogonal_t(ks[3], (4 * H, H)),
        'bg0': jnp.zeros((1, 4 * H), jnp.float32),     # b_ih + b_hh, both init to 0
        'wih1': kaiming_t(ks[4], (4 * H, H)),
        'whh1': orthogonal_t(ks[5], (4 * H, H)),
        'bg1': jnp.zeros((1, 4 * H), jnp.float32),
        'w2': jax.random.uniform(ks[6], (L * H, OUT), jnp.float32, -b2_bound, b2_bound),
        'b2': jax.random.uniform(ks[7], (1, OUT), jnp.float32, -b2_bound, b2_bound),
    }


# ---------------- pure-JAX reference for verification ----------------------
def ref_forward(x, p):
    B, S, _ = x.shape
    xh = jax.nn.relu(x @ p['w1'] + p['b1'])             # (B, S, H)
    h0 = c0 = h1 = c1 = jnp.zeros((B, H), jnp.float32)

    def cell(xt, h, c, wih, whh, bg):
        g = xt @ wih + h @ whh + bg
        i, f, gg, o = jnp.split(g, 4, axis=-1)
        c = jax.nn.sigmoid(f) * c + jax.nn.sigmoid(i) * jnp.tanh(gg)
        h = jax.nn.sigmoid(o) * jnp.tanh(c)
        return h, c

    for t in range(S):
        h0, c0 = cell(xh[:, t], h0, c0, p['wih0'], p['whh0'], p['bg0'])
        h1, c1 = cell(h0, h1, c1, p['wih1'], p['whh1'], p['bg1'])
    feat = jnp.concatenate([h0, h1], axis=-1)            # (B, 2H)
    return feat @ p['w2'] + p['b2']                      # (B, 1)


if __name__ == "__main__":
    key = jax.random.PRNGKey(0)
    kp, kx = jax.random.split(key)
    params = init_params(kp)

    B, S = 2, 8
    x = jax.random.normal(kx, (B, S, IN), jnp.float32)   # (batch, seq, input_size)

    fwd = jax.jit(lstm_model_forward)
    out = jax.block_until_ready(fwd(x, params))

    ref = ref_forward(x, params)
    assert out.shape == (B, OUT)
    assert bool(jnp.all(jnp.isfinite(out)))
    assert bool(jnp.allclose(out, ref, atol=1e-4, rtol=1e-4)), (out, ref)
    print("KERNEL_OK")
</pallas_src>

<mosaic_0001>
module attributes {stable_mosaic.version = 11 : i64} {
  func.func @lstm_model_kernel(%arg0: memref<64x1xf32, #tpu.memory_space<vmem>>, %arg1: memref<104x256xf32, #tpu.memory_space<vmem>>, %arg2: memref<8x1xf32, #tpu.memory_space<vmem>>) attributes {dimension_semantics = [], scalar_prefetch = 0 : i64, scratch_operands = 0 : i64, tpu.core_type = #tpu.core_type<tc>} {
    %c0 = arith.constant 0 : index
    %c0_0 = arith.constant 0 : index
    %0 = vector.load %arg1[%c0, %c0_0] : memref<104x256xf32, #tpu.memory_space<vmem>>, vector<64x256xf32>
    %c64 = arith.constant 64 : index
    %c0_1 = arith.constant 0 : index
    %1 = vector.load %arg1[%c64, %c0_1] : memref<104x256xf32, #tpu.memory_space<vmem>>, vector<32x128xf32>
    %c96 = arith.constant 96 : index
    %c0_2 = arith.constant 0 : index
    %2 = vector.load %arg1[%c96, %c0_2] : memref<104x256xf32, #tpu.memory_space<vmem>>, vector<1x128xf32>
    %c97 = arith.constant 97 : index
    %c0_3 = arith.constant 0 : index
    %3 = vector.load %arg1[%c97, %c0_3] : memref<104x256xf32, #tpu.memory_space<vmem>>, vector<1x128xf32>
    %c98 = arith.constant 98 : index
    %c0_4 = arith.constant 0 : index
    %4 = vector.load %arg1[%c98, %c0_4] : memref<104x256xf32, #tpu.memory_space<vmem>>, vector<1x32xf32>
    %c99 = arith.constant 99 : index
    %c0_5 = arith.constant 0 : index
    %5 = vector.load %arg1[%c99, %c0_5] : memref<104x256xf32, #tpu.memory_space<vmem>>, vector<1x32xf32>
    %c100 = arith.constant 100 : index
    %c0_6 = arith.constant 0 : index
    %6 = vector.load %arg1[%c100, %c0_6] : memref<104x256xf32, #tpu.memory_space<vmem>>, vector<1x64xf32>
    %c101 = arith.constant 101 : index
    %c0_7 = arith.constant 0 : index
    %7 = vector.load %arg1[%c101, %c0_7] : memref<104x256xf32, #tpu.memory_space<vmem>>, vector<1x1xf32>
    %c0_8 = arith.constant 0 : index
    %c0_9 = arith.constant 0 : index
    %8 = vector.load %arg0[%c0_8, %c0_9] : memref<64x1xf32, #tpu.memory_space<vmem>>, vector<64x1xf32>
    %9 = vector.broadcast %8 : vector<64x1xf32> to vector<64x32xf32>
    %10 = vector.broadcast %4 : vector<1x32xf32> to vector<64x32xf32>
    %11 = arith.mulf %9, %10 : vector<64x32xf32>
    %12 = vector.broadcast %5 : vector<1x32xf32> to vector<64x32xf32>
    %13 = arith.addf %11, %12 : vector<64x32xf32>
    %cst = arith.constant 0.000000e+00 : f32
    %14 = vector.broadcast %cst : f32 to vector<64x32xf32>
    %15 = arith.maximumf %13, %14 : vector<64x32xf32>
    %cst_10 = arith.constant dense<0.000000e+00> : vector<64x128xf32>
    %16 = tpu.matmul %15, %1, %cst_10 {dimension_numbers = #tpu.dot_dimension_numbers<[1], [0], [0], [1], [0, 0, 1, 1], [], []>} : vector<64x32xf32>, vector<32x128xf32>, vector<64x128xf32> -> vector<64x128xf32>
    %17 = vector.broadcast %2 : vector<1x128xf32> to vector<64x128xf32>
    %18 = arith.addf %16, %17 : vector<64x128xf32>
    %19 = tpu.iota {dimensions = array<i32: 1>} : vector<8x128xi32>
    %c64_i32 = arith.constant 64 : i32
    %20 = vector.broadcast %c64_i32 : i32 to vector<8x128xi32>
    %21 = arith.cmpi sge, %19, %20 : vector<8x128xi32>
    %c96_i32 = arith.constant 96 : i32
    %22 = vector.broadcast %c96_i32 : i32 to vector<8x128xi32>
    %23 = arith.cmpi slt, %19, %22 : vector<8x128xi32>
    %24 = arith.andi %21, %23 : vector<8x128xi1>
    %cst_11 = arith.constant 0.000000e+00 : f32
    %25 = vector.broadcast %cst_11 : f32 to vector<8x32xf32>
    %26 = vector.extract_strided_slice %18 {offsets = [0, 0], sizes = [8, 128], strides = [1, 1]} : vector<64x128xf32> to vector<8x128xf32>
    %27 = math.tanh %26 : vector<8x128xf32>
    %cst_12 = arith.constant 5.000000e-01 : f32
    %28 = vector.broadcast %cst_12 : f32 to vector<8x128xf32>
    %29 = arith.mulf %28, %27 : vector<8x128xf32>
    %cst_13 = arith.constant 5.000000e-01 : f32
    %30 = vector.broadcast %cst_13 : f32 to vector<8x128xf32>
    %31 = arith.addf %29, %30 : vector<8x128xf32>
    %32 = arith.select %24, %27, %31 : vector<8x128xi1>, vector<8x128xf32>
    %33 = vector.extract_strided_slice %32 {offsets = [0, 0], sizes = [8, 32], strides = [1, 1]} : vector<8x128xf32> to vector<8x32xf32>
    %34 = vector.extract_strided_slice %32 {offsets = [0, 32], sizes = [8, 32], strides = [1, 1]} : vector<8x128xf32> to vector<8x32xf32>
    %35 = vector.extract_strided_slice %32 {offsets = [0, 64], sizes = [8, 32], strides = [1, 1]} : vector<8x128xf32> to vector<8x32xf32>
    %36 = vector.extract_strided_slice %32 {offsets = [0, 96], sizes = [8, 32], strides = [1, 1]} : vector<8x128xf32> to vector<8x32xf32>
    %37 = arith.mulf %34, %25 : vector<8x32xf32>
    %38 = arith.mulf %33, %35 : vector<8x32xf32>
    %39 = arith.addf %37, %38 : vector<8x32xf32>
    %40 = math.tanh %39 : vector<8x32xf32>
    %41 = arith.mulf %36, %40 : vector<8x32xf32>
    %42 = tpu.concatenate %41, %25 in 1 : vector<8x32xf32>, vector<8x32xf32> -> vector<8x64xf32>
    %cst_14 = arith.constant dense<0.000000e+00> : vector<8x256xf32>
    %43 = tpu.matmul %42, %0, %cst_14 {dimension_numbers = #tpu.dot_dimension_numbers<[1], [0], [0], [1], [0, 0, 1, 1], [], []>} : vector<8x64xf32>, vector<64x256xf32>, vector<8x256xf32> -> vector<8x256xf32>
    %44 = vector.extract_strided_slice %43 {offsets = [0, 0], sizes = [8, 128], strides = [1, 1]} : vector<8x256xf32> to vector<8x128xf32>
    %45 = vector.broadcast %3 : vector<1x128xf32> to vector<8x128xf32>
    %46 = arith.addf %44, %45 : vector<8x128xf32>
    %47 = math.tanh %46 : vector<8x128xf32>
    %cst_15 = arith.constant 5.000000e-01 : f32
    %48 = vector.broadcast %cst_15 : f32 to vector<8x128xf32>
    %49 = arith.mulf %48, %47 : vector<8x128xf32>
    %cst_16 = arith.constant 5.000000e-01 : f32
    %50 = vector.broadcast %cst_16 : f32 to vector<8x128xf32>
    %51 = arith.addf %49, %50 : vector<8x128xf32>
    %52 = arith.select %24, %47, %51 : vector<8x128xi1>, vector<8x128xf32>
    %53 = vector.extract_strided_slice %52 {offsets = [0, 0], sizes = [8, 32], strides = [1, 1]} : vector<8x128xf32> to vector<8x32xf32>
    %54 = vector.extract_strided_slice %52 {offsets = [0, 32], sizes = [8, 32], strides = [1, 1]} : vector<8x128xf32> to vector<8x32xf32>
    %55 = vector.extract_strided_slice %52 {offsets = [0, 64], sizes = [8, 32], strides = [1, 1]} : vector<8x128xf32> to vector<8x32xf32>
    %56 = vector.extract_strided_slice %52 {offsets = [0, 96], sizes = [8, 32], strides = [1, 1]} : vector<8x128xf32> to vector<8x32xf32>
    %57 = arith.mulf %54, %25 : vector<8x32xf32>
    %58 = arith.mulf %53, %55 : vector<8x32xf32>
    %59 = arith.addf %57, %58 : vector<8x32xf32>
    %60 = math.tanh %59 : vector<8x32xf32>
    %61 = arith.mulf %56, %60 : vector<8x32xf32>
    %62 = vector.extract_strided_slice %43 {offsets = [0, 128], sizes = [8, 128], strides = [1, 1]} : vector<8x256xf32> to vector<8x128xf32>
    %63 = vector.extract_strided_slice %18 {offsets = [8, 0], sizes = [8, 128], strides = [1, 1]} : vector<64x128xf32> to vector<8x128xf32>
    %64 = arith.addf %62, %63 : vector<8x128xf32>
    %65 = math.tanh %64 : vector<8x128xf32>
    %cst_17 = arith.constant 5.000000e-01 : f32
    %66 = vector.broadcast %cst_17 : f32 to vector<8x128xf32>
    %67 = arith.mulf %66, %65 : vector<8x128xf32>
    %cst_18 = arith.constant 5.000000e-01 : f32
    %68 = vector.broadcast %cst_18 : f32 to vector<8x128xf32>
    %69 = arith.addf %67, %68 : vector<8x128xf32>
    %70 = arith.select %24, %65, %69 : vector<8x128xi1>, vector<8x128xf32>
    %71 = vector.extract_strided_slice %70 {offsets = [0, 0], sizes = [8, 32], strides = [1, 1]} : vector<8x128xf32> to vector<8x32xf32>
    %72 = vector.extract_strided_slice %70 {offsets = [0, 32], sizes = [8, 32], strides = [1, 1]} : vector<8x128xf32> to vector<8x32xf32>
    %73 = vector.extract_strided_slice %70 {offsets = [0, 64], sizes = [8, 32], strides = [1, 1]} : vector<8x128xf32> to vector<8x32xf32>
    %74 = vector.extract_strided_slice %70 {offsets = [0, 96], sizes = [8, 32], strides = [1, 1]} : vector<8x128xf32> to vector<8x32xf32>
    %75 = arith.mulf %72, %39 : vector<8x32xf32>
    %76 = arith.mulf %71, %73 : vector<8x32xf32>
    %77 = arith.addf %75, %76 : vector<8x32xf32>
    %78 = math.tanh %77 : vector<8x32xf32>
    %79 = arith.mulf %74, %78 : vector<8x32xf32>
    %80 = tpu.concatenate %79, %61 in 1 : vector<8x32xf32>, vector<8x32xf32> -> vector<8x64xf32>
    %cst_19 = arith.constant dense<0.000000e+00> : vector<8x256xf32>
    %81 = tpu.matmul %80, %0, %cst_19 {dimension_numbers = #tpu.dot_dimension_numbers<[1], [0], [0], [1], [0, 0, 1, 1], [], []>} : vector<8x64xf32>, vector<64x256xf32>, vector<8x256xf32> -> vector<8x256xf32>
    %82 = vector.extract_strided_slice %81 {offsets = [0, 0], sizes = [8, 128], strides = [1, 1]} : vector<8x256xf32> to vector<8x128xf32>
    %83 = vector.broadcast %3 : vector<1x128xf32> to vector<8x128xf32>
    %84 = arith.addf %82, %83 : vector<8x128xf32>
    %85 = math.tanh %84 : vector<8x128xf32>
    %cst_20 = arith.constant 5.000000e-01 : f32
    %86 = vector.broadcast %cst_20 : f32 to vector<8x128xf32>
    %87 = arith.mulf %86, %85 : vector<8x128xf32>
    %cst_21 = arith.constant 5.000000e-01 : f32
    %88 = vector.broadcast %cst_21 : f32 to vector<8x128xf32>
    %89 = arith.addf %87, %88 : vector<8x128xf32>
    %90 = arith.select %24, %85, %89 : vector<8x128xi1>, vector<8x128xf32>
    %91 = vector.extract_strided_slice %90 {offsets = [0, 0], sizes = [8, 32], strides = [1, 1]} : vector<8x128xf32> to vector<8x32xf32>
    %92 = vector.extract_strided_slice %90 {offsets = [0, 32], sizes = [8, 32], strides = [1, 1]} : vector<8x128xf32> to vector<8x32xf32>
    %93 = vector.extract_strided_slice %90 {offsets = [0, 64], sizes = [8, 32], strides = [1, 1]} : vector<8x128xf32> to vector<8x32xf32>
    %94 = vector.extract_strided_slice %90 {offsets = [0, 96], sizes = [8, 32], strides = [1, 1]} : vector<8x128xf32> to vector<8x32xf32>
    %95 = arith.mulf %92, %59 : vector<8x32xf32>
    %96 = arith.mulf %91, %93 : vector<8x32xf32>
    %97 = arith.addf %95, %96 : vector<8x32xf32>
    %98 = math.tanh %97 : vector<8x32xf32>
    %99 = arith.mulf %94, %98 : vector<8x32xf32>
    %100 = vector.extract_strided_slice %81 {offsets = [0, 128], sizes = [8, 128], strides = [1, 1]} : vector<8x256xf32> to vector<8x128xf32>
    %101 = vector.extract_strided_slice %18 {offsets = [16, 0], sizes = [8, 128], strides = [1, 1]} : vector<64x128xf32> to vector<8x128xf32>
    %102 = arith.addf %100, %101 : vector<8x128xf32>
    %103 = math.tanh %102 : vector<8x128xf32>
    %cst_22 = arith.constant 5.000000e-01 : f32
    %104 = vector.broadcast %cst_22 : f32 to vector<8x128xf32>
    %105 = arith.mulf %104, %103 : vector<8x128xf32>
    %cst_23 = arith.constant 5.000000e-01 : f32
    %106 = vector.broadcast %cst_23 : f32 to vector<8x128xf32>
    %107 = arith.addf %105, %106 : vector<8x128xf32>
    %108 = arith.select %24, %103, %107 : vector<8x128xi1>, vector<8x128xf32>
    %109 = vector.extract_strided_slice %108 {offsets = [0, 0], sizes = [8, 32], strides = [1, 1]} : vector<8x128xf32> to vector<8x32xf32>
    %110 = vector.extract_strided_slice %108 {offsets = [0, 32], sizes = [8, 32], strides = [1, 1]} : vector<8x128xf32> to vector<8x32xf32>
    %111 = vector.extract_strided_slice %108 {offsets = [0, 64], sizes = [8, 32], strides = [1, 1]} : vector<8x128xf32> to vector<8x32xf32>
    %112 = vector.extract_strided_slice %108 {offsets = [0, 96], sizes = [8, 32], strides = [1, 1]} : vector<8x128xf32> to vector<8x32xf32>
    %113 = arith.mulf %110, %77 : vector<8x32xf32>
    %114 = arith.mulf %109, %111 : vector<8x32xf32>
    %115 = arith.addf %113, %114 : vector<8x32xf32>
    %116 = math.tanh %115 : vector<8x32xf32>
    %117 = arith.mulf %112, %116 : vector<8x32xf32>
    %118 = tpu.concatenate %117, %99 in 1 : vector<8x32xf32>, vector<8x32xf32> -> vector<8x64xf32>
    %cst_24 = arith.constant dense<0.000000e+00> : vector<8x256xf32>
    %119 = tpu.matmul %118, %0, %cst_24 {dimension_numbers = #tpu.dot_dimension_numbers<[1], [0], [0], [1], [0, 0, 1, 1], [], []>} : vector<8x64xf32>, vector<64x256xf32>, vector<8x256xf32> -> vector<8x256xf32>
    %120 = vector.extract_strided_slice %119 {offsets = [0, 0], sizes = [8, 128], strides = [1, 1]} : vector<8x256xf32> to vector<8x128xf32>
    %121 = vector.broadcast %3 : vector<1x128xf32> to vector<8x128xf32>
    %122 = arith.addf %120, %121 : vector<8x128xf32>
    %123 = math.tanh %122 : vector<8x128xf32>
    %cst_25 = arith.constant 5.000000e-01 : f32
    %124 = vector.broadcast %cst_25 : f32 to vector<8x128xf32>
    %125 = arith.mulf %124, %123 : vector<8x128xf32>
    %cst_26 = arith.constant 5.000000e-01 : f32
    %126 = vector.broadcast %cst_26 : f32 to vector<8x128xf32>
    %127 = arith.addf %125, %126 : vector<8x128xf32>
    %128 = arith.select %24, %123, %127 : vector<8x128xi1>, vector<8x128xf32>
    %129 = vector.extract_strided_slice %128 {offsets = [0, 0], sizes = [8, 32], strides = [1, 1]} : vector<8x128xf32> to vector<8x32xf32>
    %130 = vector.extract_strided_slice %128 {offsets = [0, 32], sizes = [8, 32], strides = [1, 1]} : vector<8x128xf32> to vector<8x32xf32>
    %131 = vector.extract_strided_slice %128 {offsets = [0, 64], sizes = [8, 32], strides = [1, 1]} : vector<8x128xf32> to vector<8x32xf32>
    %132 = vector.extract_strided_slice %128 {offsets = [0, 96], sizes = [8, 32], strides = [1, 1]} : vector<8x128xf32> to vector<8x32xf32>
    %133 = arith.mulf %130, %97 : vector<8x32xf32>
    %134 = arith.mulf %129, %131 : vector<8x32xf32>
    %135 = arith.addf %133, %134 : vector<8x32xf32>
    %136 = math.tanh %135 : vector<8x32xf32>
    %137 = arith.mulf %132, %136 : vector<8x32xf32>
    %138 = vector.extract_strided_slice %119 {offsets = [0, 128], sizes = [8, 128], strides = [1, 1]} : vector<8x256xf32> to vector<8x128xf32>
    %139 = vector.extract_strided_slice %18 {offsets = [24, 0], sizes = [8, 128], strides = [1, 1]} : vector<64x128xf32> to vector<8x128xf32>
    %140 = arith.addf %138, %139 : vector<8x128xf32>
    %141 = math.tanh %140 : vector<8x128xf32>
    %cst_27 = arith.constant 5.000000e-01 : f32
    %142 = vector.broadcast %cst_27 : f32 to vector<8x128xf32>
    %143 = arith.mulf %142, %141 : vector<8x128xf32>
    %cst_28 = arith.constant 5.000000e-01 : f32
    %144 = vector.broadcast %cst_28 : f32 to vector<8x128xf32>
    %145 = arith.addf %143, %144 : vector<8x128xf32>
    %146 = arith.select %24, %141, %145 : vector<8x128xi1>, vector<8x128xf32>
    %147 = vector.extract_strided_slice %146 {offsets = [0, 0], sizes = [8, 32], strides = [1, 1]} : vector<8x128xf32> to vector<8x32xf32>
    %148 = vector.extract_strided_slice %146 {offsets = [0, 32], sizes = [8, 32], strides = [1, 1]} : vector<8x128xf32> to vector<8x32xf32>
    %149 = vector.extract_strided_slice %146 {offsets = [0, 64], sizes = [8, 32], strides = [1, 1]} : vector<8x128xf32> to vector<8x32xf32>
    %150 = vector.extract_strided_slice %146 {offsets = [0, 96], sizes = [8, 32], strides = [1, 1]} : vector<8x128xf32> to vector<8x32xf32>
    %151 = arith.mulf %148, %115 : vector<8x32xf32>
    %152 = arith.mulf %147, %149 : vector<8x32xf32>
    %153 = arith.addf %151, %152 : vector<8x32xf32>
    %154 = math.tanh %153 : vector<8x32xf32>
    %155 = arith.mulf %150, %154 : vector<8x32xf32>
    %156 = tpu.concatenate %155, %137 in 1 : vector<8x32xf32>, vector<8x32xf32> -> vector<8x64xf32>
    %cst_29 = arith.constant dense<0.000000e+00> : vector<8x256xf32>
    %157 = tpu.matmul %156, %0, %cst_29 {dimension_numbers = #tpu.dot_dimension_numbers<[1], [0], [0], [1], [0, 0, 1, 1], [], []>} : vector<8x64xf32>, vector<64x256xf32>, vector<8x256xf32> -> vector<8x256xf32>
    %158 = vector.extract_strided_slice %157 {offsets = [0, 0], sizes = [8, 128], strides = [1, 1]} : vector<8x256xf32> to vector<8x128xf32>
    %159 = vector.broadcast %3 : vector<1x128xf32> to vector<8x128xf32>
    %160 = arith.addf %158, %159 : vector<8x128xf32>
    %161 = math.tanh %160 : vector<8x128xf32>
    %cst_30 = arith.constant 5.000000e-01 : f32
    %162 = vector.broadcast %cst_30 : f32 to vector<8x128xf32>
    %163 = arith.mulf %162, %161 : vector<8x128xf32>
    %cst_31 = arith.constant 5.000000e-01 : f32
    %164 = vector.broadcast %cst_31 : f32 to vector<8x128xf32>
    %165 = arith.addf %163, %164 : vector<8x128xf32>
    %166 = arith.select %24, %161, %165 : vector<8x128xi1>, vector<8x128xf32>
    %167 = vector.extract_strided_slice %166 {offsets = [0, 0], sizes = [8, 32], strides = [1, 1]} : vector<8x128xf32> to vector<8x32xf32>
    %168 = vector.extract_strided_slice %166 {offsets = [0, 32], sizes = [8, 32], strides = [1, 1]} : vector<8x128xf32> to vector<8x32xf32>
    %169 = vector.extract_strided_slice %166 {offsets = [0, 64], sizes = [8, 32], strides = [1, 1]} : vector<8x128xf32> to vector<8x32xf32>
    %170 = vector.extract_strided_slice %166 {offsets = [0, 96], sizes = [8, 32], strides = [1, 1]} : vector<8x128xf32> to vector<8x32xf32>
    %171 = arith.mulf %168, %135 : vector<8x32xf32>
    %172 = arith.mulf %167, %169 : vector<8x32xf32>
    %173 = arith.addf %171, %172 : vector<8x32xf32>
    %174 = math.tanh %173 : vector<8x32xf32>
    %175 = arith.mulf %170, %174 : vector<8x32xf32>
    %176 = vector.extract_strided_slice %157 {offsets = [0, 128], sizes = [8, 128], strides = [1, 1]} : vector<8x256xf32> to vector<8x128xf32>
    %177 = vector.extract_strided_slice %18 {offsets = [32, 0], sizes = [8, 128], strides = [1, 1]} : vector<64x128xf32> to vector<8x128xf32>
    %178 = arith.addf %176, %177 : vector<8x128xf32>
    %179 = math.tanh %178 : vector<8x128xf32>
    %cst_32 = arith.constant 5.000000e-01 : f32
    %180 = vector.broadcast %cst_32 : f32 to vector<8x128xf32>
    %181 = arith.mulf %180, %179 : vector<8x128xf32>
    %cst_33 = arith.constant 5.000000e-01 : f32
    %182 = vector.broadcast %cst_33 : f32 to vector<8x128xf32>
    %183 = arith.addf %181, %182 : vector<8x128xf32>
    %184 = arith.select %24, %179, %183 : vector<8x128xi1>, vector<8x128xf32>
    %185 = vector.extract_strided_slice %184 {offsets = [0, 0], sizes = [8, 32], strides = [1, 1]} : vector<8x128xf32> to vector<8x32xf32>
    %186 = vector.extract_strided_slice %184 {offsets = [0, 32], sizes = [8, 32], strides = [1, 1]} : vector<8x128xf32> to vector<8x32xf32>
    %187 = vector.extract_strided_slice %184 {offsets = [0, 64], sizes = [8, 32], strides = [1, 1]} : vector<8x128xf32> to vector<8x32xf32>
    %188 = vector.extract_strided_slice %184 {offsets = [0, 96], sizes = [8, 32], strides = [1, 1]} : vector<8x128xf32> to vector<8x32xf32>
    %189 = arith.mulf %186, %153 : vector<8x32xf32>
    %190 = arith.mulf %185, %187 : vector<8x32xf32>
    %191 = arith.addf %189, %190 : vector<8x32xf32>
    %192 = math.tanh %191 : vector<8x32xf32>
    %193 = arith.mulf %188, %192 : vector<8x32xf32>
    %194 = tpu.concatenate %193, %175 in 1 : vector<8x32xf32>, vector<8x32xf32> -> vector<8x64xf32>
    %cst_34 = arith.constant dense<0.000000e+00> : vector<8x256xf32>
    %195 = tpu.matmul %194, %0, %cst_34 {dimension_numbers = #tpu.dot_dimension_numbers<[1], [0], [0], [1], [0, 0, 1, 1], [], []>} : vector<8x64xf32>, vector<64x256xf32>, vector<8x256xf32> -> vector<8x256xf32>
    %196 = vector.extract_strided_slice %195 {offsets = [0, 0], sizes = [8, 128], strides = [1, 1]} : vector<8x256xf32> to vector<8x128xf32>
    %197 = vector.broadcast %3 : vector<1x128xf32> to vector<8x128xf32>
    %198 = arith.addf %196, %197 : vector<8x128xf32>
    %199 = math.tanh %198 : vector<8x128xf32>
    %cst_35 = arith.constant 5.000000e-01 : f32
    %200 = vector.broadcast %cst_35 : f32 to vector<8x128xf32>
    %201 = arith.mulf %200, %199 : vector<8x128xf32>
    %cst_36 = arith.constant 5.000000e-01 : f32
    %202 = vector.broadcast %cst_36 : f32 to vector<8x128xf32>
    %203 = arith.addf %201, %202 : vector<8x128xf32>
    %204 = arith.select %24, %199, %203 : vector<8x128xi1>, vector<8x128xf32>
    %205 = vector.extract_strided_slice %204 {offsets = [0, 0], sizes = [8, 32], strides = [1, 1]} : vector<8x128xf32> to vector<8x32xf32>
    %206 = vector.extract_strided_slice %204 {offsets = [0, 32], sizes = [8, 32], strides = [1, 1]} : vector<8x128xf32> to vector<8x32xf32>
    %207 = vector.extract_strided_slice %204 {offsets = [0, 64], sizes = [8, 32], strides = [1, 1]} : vector<8x128xf32> to vector<8x32xf32>
    %208 = vector.extract_strided_slice %204 {offsets = [0, 96], sizes = [8, 32], strides = [1, 1]} : vector<8x128xf32> to vector<8x32xf32>
    %209 = arith.mulf %206, %173 : vector<8x32xf32>
    %210 = arith.mulf %205, %207 : vector<8x32xf32>
    %211 = arith.addf %209, %210 : vector<8x32xf32>
    %212 = math.tanh %211 : vector<8x32xf32>
    %213 = arith.mulf %208, %212 : vector<8x32xf32>
    %214 = vector.extract_strided_slice %195 {offsets = [0, 128], sizes = [8, 128], strides = [1, 1]} : vector<8x256xf32> to vector<8x128xf32>
    %215 = vector.extract_strided_slice %18 {offsets = [40, 0], sizes = [8, 128], strides = [1, 1]} : vector<64x128xf32> to vector<8x128xf32>
    %216 = arith.addf %214, %215 : vector<8x128xf32>
    %217 = math.tanh %216 : vector<8x128xf32>
    %cst_37 = arith.constant 5.000000e-01 : f32
    %218 = vector.broadcast %cst_37 : f32 to vector<8x128xf32>
    %219 = arith.mulf %218, %217 : vector<8x128xf32>
    %cst_38 = arith.constant 5.000000e-01 : f32
    %220 = vector.broadcast %cst_38 : f32 to vector<8x128xf32>
    %221 = arith.addf %219, %220 : vector<8x128xf32>
    %222 = arith.select %24, %217, %221 : vector<8x128xi1>, vector<8x128xf32>
    %223 = vector.extract_strided_slice %222 {offsets = [0, 0], sizes = [8, 32], strides = [1, 1]} : vector<8x128xf32> to vector<8x32xf32>
    %224 = vector.extract_strided_slice %222 {offsets = [0, 32], sizes = [8, 32], strides = [1, 1]} : vector<8x128xf32> to vector<8x32xf32>
    %225 = vector.extract_strided_slice %222 {offsets = [0, 64], sizes = [8, 32], strides = [1, 1]} : vector<8x128xf32> to vector<8x32xf32>
    %226 = vector.extract_strided_slice %222 {offsets = [0, 96], sizes = [8, 32], strides = [1, 1]} : vector<8x128xf32> to vector<8x32xf32>
    %227 = arith.mulf %224, %191 : vector<8x32xf32>
    %228 = arith.mulf %223, %225 : vector<8x32xf32>
    %229 = arith.addf %227, %228 : vector<8x32xf32>
    %230 = math.tanh %229 : vector<8x32xf32>
    %231 = arith.mulf %226, %230 : vector<8x32xf32>
    %232 = tpu.concatenate %231, %213 in 1 : vector<8x32xf32>, vector<8x32xf32> -> vector<8x64xf32>
    %cst_39 = arith.constant dense<0.000000e+00> : vector<8x256xf32>
    %233 = tpu.matmul %232, %0, %cst_39 {dimension_numbers = #tpu.dot_dimension_numbers<[1], [0], [0], [1], [0, 0, 1, 1], [], []>} : vector<8x64xf32>, vector<64x256xf32>, vector<8x256xf32> -> vector<8x256xf32>
    %234 = vector.extract_strided_slice %233 {offsets = [0, 0], sizes = [8, 128], strides = [1, 1]} : vector<8x256xf32> to vector<8x128xf32>
    %235 = vector.broadcast %3 : vector<1x128xf32> to vector<8x128xf32>
    %236 = arith.addf %234, %235 : vector<8x128xf32>
    %237 = math.tanh %236 : vector<8x128xf32>
    %cst_40 = arith.constant 5.000000e-01 : f32
    %238 = vector.broadcast %cst_40 : f32 to vector<8x128xf32>
    %239 = arith.mulf %238, %237 : vector<8x128xf32>
    %cst_41 = arith.constant 5.000000e-01 : f32
    %240 = vector.broadcast %cst_41 : f32 to vector<8x128xf32>
    %241 = arith.addf %239, %240 : vector<8x128xf32>
    %242 = arith.select %24, %237, %241 : vector<8x128xi1>, vector<8x128xf32>
    %243 = vector.extract_strided_slice %242 {offsets = [0, 0], sizes = [8, 32], strides = [1, 1]} : vector<8x128xf32> to vector<8x32xf32>
    %244 = vector.extract_strided_slice %242 {offsets = [0, 32], sizes = [8, 32], strides = [1, 1]} : vector<8x128xf32> to vector<8x32xf32>
    %245 = vector.extract_strided_slice %242 {offsets = [0, 64], sizes = [8, 32], strides = [1, 1]} : vector<8x128xf32> to vector<8x32xf32>
    %246 = vector.extract_strided_slice %242 {offsets = [0, 96], sizes = [8, 32], strides = [1, 1]} : vector<8x128xf32> to vector<8x32xf32>
    %247 = arith.mulf %244, %211 : vector<8x32xf32>
    %248 = arith.mulf %243, %245 : vector<8x32xf32>
    %249 = arith.addf %247, %248 : vector<8x32xf32>
    %250 = math.tanh %249 : vector<8x32xf32>
    %251 = arith.mulf %246, %250 : vector<8x32xf32>
    %252 = vector.extract_strided_slice %233 {offsets = [0, 128], sizes = [8, 128], strides = [1, 1]} : vector<8x256xf32> to vector<8x128xf32>
    %253 = vector.extract_strided_slice %18 {offsets = [48, 0], sizes = [8, 128], strides = [1, 1]} : vector<64x128xf32> to vector<8x128xf32>
    %254 = arith.addf %252, %253 : vector<8x128xf32>
    %255 = math.tanh %254 : vector<8x128xf32>
    %cst_42 = arith.constant 5.000000e-01 : f32
    %256 = vector.broadcast %cst_42 : f32 to vector<8x128xf32>
    %257 = arith.mulf %256, %255 : vector<8x128xf32>
    %cst_43 = arith.constant 5.000000e-01 : f32
    %258 = vector.broadcast %cst_43 : f32 to vector<8x128xf32>
    %259 = arith.addf %257, %258 : vector<8x128xf32>
    %260 = arith.select %24, %255, %259 : vector<8x128xi1>, vector<8x128xf32>
    %261 = vector.extract_strided_slice %260 {offsets = [0, 0], sizes = [8, 32], strides = [1, 1]} : vector<8x128xf32> to vector<8x32xf32>
    %262 = vector.extract_strided_slice %260 {offsets = [0, 32], sizes = [8, 32], strides = [1, 1]} : vector<8x128xf32> to vector<8x32xf32>
    %263 = vector.extract_strided_slice %260 {offsets = [0, 64], sizes = [8, 32], strides = [1, 1]} : vector<8x128xf32> to vector<8x32xf32>
    %264 = vector.extract_strided_slice %260 {offsets = [0, 96], sizes = [8, 32], strides = [1, 1]} : vector<8x128xf32> to vector<8x32xf32>
    %265 = arith.mulf %262, %229 : vector<8x32xf32>
    %266 = arith.mulf %261, %263 : vector<8x32xf32>
    %267 = arith.addf %265, %266 : vector<8x32xf32>
    %268 = math.tanh %267 : vector<8x32xf32>
    %269 = arith.mulf %264, %268 : vector<8x32xf32>
    %270 = tpu.concatenate %269, %251 in 1 : vector<8x32xf32>, vector<8x32xf32> -> vector<8x64xf32>
    %cst_44 = arith.constant dense<0.000000e+00> : vector<8x256xf32>
    %271 = tpu.matmul %270, %0, %cst_44 {dimension_numbers = #tpu.dot_dimension_numbers<[1], [0], [0], [1], [0, 0, 1, 1], [], []>} : vector<8x64xf32>, vector<64x256xf32>, vector<8x256xf32> -> vector<8x256xf32>
    %272 = vector.extract_strided_slice %271 {offsets = [0, 0], sizes = [8, 128], strides = [1, 1]} : vector<8x256xf32> to vector<8x128xf32>
    %273 = vector.broadcast %3 : vector<1x128xf32> to vector<8x128xf32>
    %274 = arith.addf %272, %273 : vector<8x128xf32>
    %275 = math.tanh %274 : vector<8x128xf32>
    %cst_45 = arith.constant 5.000000e-01 : f32
    %276 = vector.broadcast %cst_45 : f32 to vector<8x128xf32>
    %277 = arith.mulf %276, %275 : vector<8x128xf32>
    %cst_46 = arith.constant 5.000000e-01 : f32
    %278 = vector.broadcast %cst_46 : f32 to vector<8x128xf32>
    %279 = arith.addf %277, %278 : vector<8x128xf32>
    %280 = arith.select %24, %275, %279 : vector<8x128xi1>, vector<8x128xf32>
    %281 = vector.extract_strided_slice %280 {offsets = [0, 0], sizes = [8, 32], strides = [1, 1]} : vector<8x128xf32> to vector<8x32xf32>
    %282 = vector.extract_strided_slice %280 {offsets = [0, 32], sizes = [8, 32], strides = [1, 1]} : vector<8x128xf32> to vector<8x32xf32>
    %283 = vector.extract_strided_slice %280 {offsets = [0, 64], sizes = [8, 32], strides = [1, 1]} : vector<8x128xf32> to vector<8x32xf32>
    %284 = vector.extract_strided_slice %280 {offsets = [0, 96], sizes = [8, 32], strides = [1, 1]} : vector<8x128xf32> to vector<8x32xf32>
    %285 = arith.mulf %282, %249 : vector<8x32xf32>
    %286 = arith.mulf %281, %283 : vector<8x32xf32>
    %287 = arith.addf %285, %286 : vector<8x32xf32>
    %288 = math.tanh %287 : vector<8x32xf32>
    %289 = arith.mulf %284, %288 : vector<8x32xf32>
    %290 = vector.extract_strided_slice %271 {offsets = [0, 128], sizes = [8, 128], strides = [1, 1]} : vector<8x256xf32> to vector<8x128xf32>
    %291 = vector.extract_strided_slice %18 {offsets = [56, 0], sizes = [8, 128], strides = [1, 1]} : vector<64x128xf32> to vector<8x128xf32>
    %292 = arith.addf %290, %291 : vector<8x128xf32>
    %293 = math.tanh %292 : vector<8x128xf32>
    %cst_47 = arith.constant 5.000000e-01 : f32
    %294 = vector.broadcast %cst_47 : f32 to vector<8x128xf32>
    %295 = arith.mulf %294, %293 : vector<8x128xf32>
    %cst_48 = arith.constant 5.000000e-01 : f32
    %296 = vector.broadcast %cst_48 : f32 to vector<8x128xf32>
    %297 = arith.addf %295, %296 : vector<8x128xf32>
    %298 = arith.select %24, %293, %297 : vector<8x128xi1>, vector<8x128xf32>
    %299 = vector.extract_strided_slice %298 {offsets = [0, 0], sizes = [8, 32], strides = [1, 1]} : vector<8x128xf32> to vector<8x32xf32>
    %300 = vector.extract_strided_slice %298 {offsets = [0, 32], sizes = [8, 32], strides = [1, 1]} : vector<8x128xf32> to vector<8x32xf32>
    %301 = vector.extract_strided_slice %298 {offsets = [0, 64], sizes = [8, 32], strides = [1, 1]} : vector<8x128xf32> to vector<8x32xf32>
    %302 = vector.extract_strided_slice %298 {offsets = [0, 96], sizes = [8, 32], strides = [1, 1]} : vector<8x128xf32> to vector<8x32xf32>
    %303 = arith.mulf %300, %267 : vector<8x32xf32>
    %304 = arith.mulf %299, %301 : vector<8x32xf32>
    %305 = arith.addf %303, %304 : vector<8x32xf32>
    %306 = math.tanh %305 : vector<8x32xf32>
    %307 = arith.mulf %302, %306 : vector<8x32xf32>
    %308 = tpu.concatenate %307, %289 in 1 : vector<8x32xf32>, vector<8x32xf32> -> vector<8x64xf32>
    %cst_49 = arith.constant dense<0.000000e+00> : vector<8x256xf32>
    %309 = tpu.matmul %308, %0, %cst_49 {dimension_numbers = #tpu.dot_dimension_numbers<[1], [0], [0], [1], [0, 0, 1, 1], [], []>} : vector<8x64xf32>, vector<64x256xf32>, vector<8x256xf32> -> vector<8x256xf32>
    %310 = vector.extract_strided_slice %309 {offsets = [0, 0], sizes = [8, 128], strides = [1, 1]} : vector<8x256xf32> to vector<8x128xf32>
    %311 = vector.broadcast %3 : vector<1x128xf32> to vector<8x128xf32>
    %312 = arith.addf %310, %311 : vector<8x128xf32>
    %313 = math.tanh %312 : vector<8x128xf32>
    %cst_50 = arith.constant 5.000000e-01 : f32
    %314 = vector.broadcast %cst_50 : f32 to vector<8x128xf32>
    %315 = arith.mulf %314, %313 : vector<8x128xf32>
    %cst_51 = arith.constant 5.000000e-01 : f32
    %316 = vector.broadcast %cst_51 : f32 to vector<8x128xf32>
    %317 = arith.addf %315, %316 : vector<8x128xf32>
    %318 = arith.select %24, %313, %317 : vector<8x128xi1>, vector<8x128xf32>
    %319 = vector.extract_strided_slice %318 {offsets = [0, 0], sizes = [8, 32], strides = [1, 1]} : vector<8x128xf32> to vector<8x32xf32>
    %320 = vector.extract_strided_slice %318 {offsets = [0, 32], sizes = [8, 32], strides = [1, 1]} : vector<8x128xf32> to vector<8x32xf32>
    %321 = vector.extract_strided_slice %318 {offsets = [0, 64], sizes = [8, 32], strides = [1, 1]} : vector<8x128xf32> to vector<8x32xf32>
    %322 = vector.extract_strided_slice %318 {offsets = [0, 96], sizes = [8, 32], strides = [1, 1]} : vector<8x128xf32> to vector<8x32xf32>
    %323 = arith.mulf %320, %287 : vector<8x32xf32>
    %324 = arith.mulf %319, %321 : vector<8x32xf32>
    %325 = arith.addf %323, %324 : vector<8x32xf32>
    %326 = math.tanh %325 : vector<8x32xf32>
    %327 = arith.mulf %322, %326 : vector<8x32xf32>
    %328 = tpu.concatenate %307, %327 in 1 : vector<8x32xf32>, vector<8x32xf32> -> vector<8x64xf32>
    %329 = vector.broadcast %6 : vector<1x64xf32> to vector<8x64xf32>
    %330 = arith.mulf %328, %329 : vector<8x64xf32>
    %cst_52 = arith.constant dense<0.000000e+00> : vector<8xf32>
    %331 = vector.multi_reduction <add>, %330, %cst_52 [1] : vector<8x64xf32> to vector<8xf32>
    %332 = vector.shape_cast %331 : vector<8xf32> to vector<8x1xf32>
    %333 = vector.broadcast %7 : vector<1x1xf32> to vector<8x1xf32>
    %334 = arith.addf %332, %333 : vector<8x1xf32>
    %c0_53 = arith.constant 0 : index
    %c0_54 = arith.constant 0 : index
    %335 = vector.load %arg2[%c0_53, %c0_54] : memref<8x1xf32, #tpu.memory_space<vmem>>, vector<8x1xf32>
    tpu.vector_store %arg2[%c0_53, %c0_54], %334 {strides = array<i32>} : memref<8x1xf32, #tpu.memory_space<vmem>>, vector<8x1xf32>,
    return
  }
}

</mosaic_0001>

<llo_original>
// kernel: lstm_model_forward.1
$region0: #{lstm_model_forward.1}
  #allocation0 [shape = 'u32[]', space=smem, size = 0x4, offset = 0x4, fixed_abs, tag = 'smem constant byte address 0x4 - core index']
  #allocation1 [shape = 'u32[144,128]{1,0:T(1,128)}', space=vmem, size = 0x12000, scoped, tag = 'internal scratch']
  %s0 = inlined_call_operand.vmem [shape: f32[64,1], index: 0, kind: input, shape index: {}]
  %s1 = inlined_call_operand.vmem [shape: f32[104,256], index: 1, kind: input, shape index: {}]
  %s2 = inlined_call_operand.vmem [shape: f32[8,1], index: 2, kind: output, shape index: {}]
  %s3 = sld [smem:[#allocation0]]
  $region18: #{lstm_model_forward.1} parent=0
    _
  %s5 = ssub.s32 1, %s3
  %s6 = scalar_select 0, %s5, %s3
  // Predicated region
  $region2: #{lstm_model_forward.1} parent=0 // pred_check
    _
  $region3: #{lstm_model_forward.1} parent=0 // pred_check_branch
    %8 = sbr.rel (0) target = $region5
  $region4: #{lstm_model_forward.1} parent=0 // pred_region
    _
  $region5: #{lstm_model_forward.1} parent=0 // pred_fallthru
    _
  // Predicated region
  $region6: #{lstm_model_forward.1} parent=0 // pred_check
    _
  $region7: #{lstm_model_forward.1} parent=0 // pred_check_branch
    %10 = sbr.rel (0) target = $region9
  $region8: #{lstm_model_forward.1} parent=0 // pred_region
    _
  $region9: #{lstm_model_forward.1} parent=0 // pred_fallthru
    _
  %v11 = vld [vmem:[%s1] sm:$0xff]
  %v12 = vld [vmem:[%s1 + $0x8] sm:$0xff]
  %v13 = vld [vmem:[%s1 + $0x10] sm:$0xff]
  %v14 = vld [vmem:[%s1 + $0x18] sm:$0xff]
  %v15 = vld [vmem:[%s1 + $0x20] sm:$0xff]
  %v16 = vld [vmem:[%s1 + $0x28] sm:$0xff]
  %v17 = vld [vmem:[%s1 + $0x30] sm:$0xff]
  %v18 = vld [vmem:[%s1 + $0x38] sm:$0xff]
  %v19 = vld [vmem:[%s1 + $0x40] sm:$0xff]
  %v20 = vld [vmem:[%s1 + $0x48] sm:$0xff]
  %v21 = vld [vmem:[%s1 + $0x50] sm:$0xff]
  %v22 = vld [vmem:[%s1 + $0x58] sm:$0xff]
  %v23 = vld [vmem:[%s1 + $0x60] sm:$0xff]
  %v24 = vld [vmem:[%s1 + $0x68] sm:$0xff]
  %v25 = vld [vmem:[%s1 + $0x70] sm:$0xff]
  %v26 = vld [vmem:[%s1 + $0x78] sm:$0xff]
  %v27 = vld [vmem:[%s1 + $0x80] sm:$0xff]
  %v28 = vld [vmem:[%s1 + $0x90] sm:$0xff]
  %v29 = vld [vmem:[%s1 + $0xa0] sm:$0xff]
  %v30 = vld [vmem:[%s1 + $0xb0] sm:$0xff]
  %v31 = vld [vmem:[%s1 + $0xc0] ss:$0 sm:$0xff]
  %v32 = vld [vmem:[%s1 + $0xc1] ss:$0 sm:$0xff]
  %v33 = vld [vmem:[%s1 + $0xc2] ss:$0 sm:$0xff]
  %v34 = vld [vmem:[%s1 + $0xc3] ss:$0 sm:$0xff]
  %v35 = vld [vmem:[%s1 + $0xc4] ss:$0 sm:$0xff]
  %v36 = vld [vmem:[%s1 + $0xc5] ss:$0 sm:$0xff]
  %v37 = vld [vmem:[%s0] sm:$0xff]
  %v38 = vld [vmem:[%s0 + $0x8] sm:$0xff]
  %v39 = vld [vmem:[%s0 + $0x10] sm:$0xff]
  %v40 = vld [vmem:[%s0 + $0x18] sm:$0xff]
  %v41 = vld [vmem:[%s0 + $0x20] sm:$0xff]
  %v42 = vld [vmem:[%s0 + $0x28] sm:$0xff]
  %v43 = vld [vmem:[%s0 + $0x30] sm:$0xff]
  %v44 = vld [vmem:[%s0 + $0x38] sm:$0xff]
  %46 = vset.pattern.permute.xlu0 0
  %47 = vperm.xlu0 %46, %v37
  %v48 = vpop.permute.xlu0 %47
  %51 = vset.pattern.permute.xlu0 0
  %52 = vperm.xlu0 %51, %v38
  %v53 = vpop.permute.xlu0 %52
  %56 = vset.pattern.permute.xlu0 0
  %57 = vperm.xlu0 %56, %v39
  %v58 = vpop.permute.xlu0 %57
  %61 = vset.pattern.permute.xlu0 0
  %62 = vperm.xlu0 %61, %v40
  %v63 = vpop.permute.xlu0 %62
  %66 = vset.pattern.permute.xlu0 0
  %67 = vperm.xlu0 %66, %v41
  %v68 = vpop.permute.xlu0 %67
  %71 = vset.pattern.permute.xlu0 0
  %72 = vperm.xlu0 %71, %v42
  %v73 = vpop.permute.xlu0 %72
  %76 = vset.pattern.permute.xlu0 0
  %77 = vperm.xlu0 %76, %v43
  %v78 = vpop.permute.xlu0 %77
  %81 = vset.pattern.permute.xlu0 0
  %82 = vperm.xlu0 %81, %v44
  %v83 = vpop.permute.xlu0 %82
  %v85 = vmul.f32 %v48, %v33
  %v86 = vmul.f32 %v53, %v33
  %v87 = vmul.f32 %v58, %v33
  %v88 = vmul.f32 %v63, %v33
  %v89 = vmul.f32 %v68, %v33
  %v90 = vmul.f32 %v73, %v33
  %v91 = vmul.f32 %v78, %v33
  %v92 = vmul.f32 %v83, %v33
  %v93 = vadd.f32 %v85, %v34
  %v94 = vadd.f32 %v86, %v34
  %v95 = vadd.f32 %v87, %v34
  %v96 = vadd.f32 %v88, %v34
  %v97 = vadd.f32 %v89, %v34
  %v98 = vadd.f32 %v90, %v34
  %v99 = vadd.f32 %v91, %v34
  %v100 = vadd.f32 %v92, %v34
  %v101 = vmax.f32 %v93, 0.0
  %v102 = vmax.f32 %v94, 0.0
  %v103 = vmax.f32 %v95, 0.0
  %v104 = vmax.f32 %v96, 0.0
  %v105 = vmax.f32 %v97, 0.0
  %v106 = vmax.f32 %v98, 0.0
  %v107 = vmax.f32 %v99, 0.0
  %v108 = vmax.f32 %v100, 0.0
  %vm109 = vcmask 261120
  %v111 = vsel %vm109, %v101, 0
  %v114 = vsel %vm109, %v102, 0
  %v117 = vsel %vm109, %v103, 0
  %v120 = vsel %vm109, %v104, 0
  %v123 = vsel %vm109, %v105, 0
  %v126 = vsel %vm109, %v106, 0
  %v129 = vsel %vm109, %v107, 0
  %v132 = vsel %vm109, %v108, 0
  %134 = vmatprep.subr.mxu0 0.0
  %135 = vmatpush1.msra.mxu0 %v27
  %136 = vmatprep.subr.mxu0 0.0
  %137 = vmatpush1.msra.mxu0 %v28
  %138 = vmatprep.subr.mxu0 0.0
  %139 = vmatpush1.msra.mxu0 %v29
  %140 = vmatprep.subr.mxu0 0.0
  %141 = vmatpush1.msra.mxu0 %v30
  %142 = vmatprep.subr.mxu0 0.0
  %143 = vmatpush1.msra.mxu0 0.0
  %144 = vmatprep.subr.mxu0 0.0
  %145 = vmatpush1.msra.mxu0 0.0
  %146 = vmatprep.subr.mxu0 0.0
  %147 = vmatpush1.msra.mxu0 0.0
  %148 = vmatprep.subr.mxu0 0.0
  %149 = vmatpush1.msra.mxu0 0.0
  %150 = vmatprep.subr.mxu0 0.0
  %151 = vmatpush1.msra.mxu0 0.0
  %152 = vmatprep.subr.mxu0 0.0
  %153 = vmatpush1.msra.mxu0 0.0
  %154 = vmatprep.subr.mxu0 0.0
  %155 = vmatpush1.msra.mxu0 0.0
  %156 = vmatprep.subr.mxu0 0.0
  %157 = vmatpush1.msra.mxu0 0.0
  %158 = vmatprep.subr.mxu0 0.0
  %159 = vmatpush1.msra.mxu0 0.0
  %160 = vmatprep.subr.mxu0 0.0
  %161 = vmatpush1.msra.mxu0 0.0
  %162 = vmatprep.subr.mxu0 0.0
  %163 = vmatpush1.msra.mxu0 0.0
  %164 = vmatprep.subr.mxu0 0.0
  %165 = vmatpush1.msra.mxu0 0.0
  %166 = vmatprep.subr.mxu0 0.0
  %167 = vmatpush1.msra.mxu0 0.0
  %168 = vmatprep.subr.mxu0 0.0
  %169 = vmatpush1.msra.mxu0 0.0
  %170 = vmatprep.subr.mxu0 0.0
  %171 = vmatpush1.msra.mxu0 0.0
  %172 = vmatprep.subr.mxu0 0.0
  %173 = vmatpush1.msra.mxu0 0.0
  %174 = vmatprep.subr.mxu0 0.0
  %175 = vmatpush1.msra.mxu0 0.0
  %176 = vmatprep.subr.mxu0 0.0
  %177 = vmatpush1.msra.mxu0 0.0
  %178 = vmatprep.subr.mxu0 0.0
  %179 = vmatpush1.msra.mxu0 0.0
  %180 = vmatprep.subr.mxu0 0.0
  %181 = vmatpush1.msra.mxu0 0.0
  %182 = vmatprep.subr.mxu0 0.0
  %183 = vmatpush1.msra.mxu0 0.0
  %184 = vmatprep.subr.mxu0 0.0
  %185 = vmatpush1.msra.mxu0 0.0
  %186 = vmatprep.subr.mxu0 0.0
  %187 = vmatpush1.msra.mxu0 0.0
  %188 = vmatprep.subr.mxu0 0.0
  %189 = vmatpush1.msra.mxu0 0.0
  %190 = vmatprep.subr.mxu0 0.0
  %191 = vmatpush1.msra.mxu0 0.0
  %192 = vmatprep.subr.mxu0 0.0
  %193 = vmatpush1.msra.mxu0 0.0
  %194 = vmatprep.subr.mxu0 0.0
  %195 = vmatpush1.msra.mxu0 0.0
  %196 = vmatprep.subr.mxu0 0.0
  %197 = vmatpush1.msra.mxu0 0.0
  %198 = vmatprep.mubr.f32.mxu0 0.0
  %199 = vmatmul.mubr.f32.gmra.mrb[0].mxu0 %v111
  %v200 = vpop.f32.mrb[0].mxu0
  %v201 = vadd.f32 %v31, %v200
  %v202 = vpop.f32.mrb[0].mxu0
  %203 = vmatprep.mubr.f32.mxu0 0.0
  %204 = vmatmul.mubr.f32.gmra.mrb[0].mxu0 %v114
  %v205 = vpop.f32.mrb[0].mxu0
  %v206 = vadd.f32 %v31, %v205
  %v207 = vpop.f32.mrb[0].mxu0
  %208 = vmatprep.mubr.f32.mxu0 0.0
  %209 = vmatmul.mubr.f32.gmra.mrb[0].mxu0 %v117
  %v210 = vpop.f32.mrb[0].mxu0
  %v211 = vadd.f32 %v31, %v210
  %v212 = vpop.f32.mrb[0].mxu0
  %213 = vmatprep.mubr.f32.mxu0 0.0
  %214 = vmatmul.mubr.f32.gmra.mrb[0].mxu0 %v120
  %v215 = vpop.f32.mrb[0].mxu0
  %v216 = vadd.f32 %v31, %v215
  %v217 = vpop.f32.mrb[0].mxu0
  %218 = vmatprep.mubr.f32.mxu0 0.0
  %219 = vmatmul.mubr.f32.gmra.mrb[0].mxu0 %v123
  %v220 = vpop.f32.mrb[0].mxu0
  %v221 = vadd.f32 %v31, %v220
  %v222 = vpop.f32.mrb[0].mxu0
  %223 = vmatprep.mubr.f32.mxu0 0.0
  %224 = vmatmul.mubr.f32.gmra.mrb[0].mxu0 %v126
  %v225 = vpop.f32.mrb[0].mxu0
  %v226 = vadd.f32 %v31, %v225
  %v227 = vpop.f32.mrb[0].mxu0
  %228 = vmatprep.mubr.f32.mxu0 0.0
  %229 = vmatmul.mubr.f32.gmra.mrb[0].mxu0 %v129
  %v230 = vpop.f32.mrb[0].mxu0
  %v231 = vadd.f32 %v31, %v230
  %v232 = vpop.f32.mrb[0].mxu0
  %233 = vmatprep.mubr.f32.mxu0 0.0
  %234 = vmatmul.mubr.f32.gmra.mrb[0].mxu0 %v132
  %v235 = vpop.f32.mrb[0].mxu0
  %v236 = vadd.f32 %v31, %v235
  %v237 = vpop.f32.mrb[0].mxu0
  %238 = vdwg.mxu0
  %v239 = vlaneseq
  %v240 = vand.u32 %v239, 127
  %vm241 = vcmp.ge.s32.totalorder %v240, 64
  %vm242 = vcmp.lt.s32.totalorder %v240, 96
  %vm243 = vmand %vm241, %vm242
  %v244 = vtanh.pop %v201
  %v245 = vmul.f32 %v244, 0.5
  %v246 = vadd.f32 %v245, 0.5
  %v247 = vsel %vm243, %v244, %v246
  %v248 = vmul.f32 %v247, 0.0
  %250 = vrot.lane.b32.xlu0 %v247, 64
  %v251 = vpop.permute.xlu0 %250
  %v253 = vmul.f32 %v247, %v251
  %255 = vrot.lane.b32.xlu0 %v253, 32
  %v256 = vpop.permute.xlu0 %255
  %v258 = vadd.f32 %v248, %v256
  %v259 = vtanh.pop %v258
  %261 = vrot.lane.b32.xlu0 %v259, 64
  %v262 = vpop.permute.xlu0 %261
  %v264 = vmul.f32 %v247, %v262
  %266 = vrot.lane.b32.xlu0 %v264, 32
  %v267 = vpop.permute.xlu0 %266
  %v269 = vsel %vm109, %v267, 0.0
  %vm270 = vcmask 523264
  %v272 = vsel %vm270, %v269, 0
  %274 = vmatprep.subr.mxu0 %v12
  %275 = vmatpush1.msra.mxu0 %v11
  %276 = vmatprep.subr.mxu0 %v14
  %277 = vmatpush1.msra.mxu0 %v13
  %278 = vmatprep.subr.mxu0 %v16
  %279 = vmatpush1.msra.mxu0 %v15
  %280 = vmatprep.subr.mxu0 %v18
  %281 = vmatpush1.msra.mxu0 %v17
  %282 = vmatprep.subr.mxu0 %v20
  %283 = vmatpush1.msra.mxu0 %v19
  %284 = vmatprep.subr.mxu0 %v22
  %285 = vmatpush1.msra.mxu0 %v21
  %286 = vmatprep.subr.mxu0 %v24
  %287 = vmatpush1.msra.mxu0 %v23
  %288 = vmatprep.subr.mxu0 %v26
  %289 = vmatpush1.msra.mxu0 %v25
  %290 = vmatprep.subr.mxu0 0.0
  %291 = vmatpush1.msra.mxu0 0.0
  %292 = vmatprep.subr.mxu0 0.0
  %293 = vmatpush1.msra.mxu0 0.0
  %294 = vmatprep.subr.mxu0 0.0
  %295 = vmatpush1.msra.mxu0 0.0
  %296 = vmatprep.subr.mxu0 0.0
  %297 = vmatpush1.msra.mxu0 0.0
  %298 = vmatprep.subr.mxu0 0.0
  %299 = vmatpush1.msra.mxu0 0.0
  %300 = vmatprep.subr.mxu0 0.0
  %301 = vmatpush1.msra.mxu0 0.0
  %302 = vmatprep.subr.mxu0 0.0
  %303 = vmatpush1.msra.mxu0 0.0
  %304 = vmatprep.subr.mxu0 0.0
  %305 = vmatpush1.msra.mxu0 0.0
  %306 = vmatprep.subr.mxu0 0.0
  %307 = vmatpush1.msra.mxu0 0.0
  %308 = vmatprep.subr.mxu0 0.0
  %309 = vmatpush1.msra.mxu0 0.0
  %310 = vmatprep.subr.mxu0 0.0
  %311 = vmatpush1.msra.mxu0 0.0
  %312 = vmatprep.subr.mxu0 0.0
  %313 = vmatpush1.msra.mxu0 0.0
  %314 = vmatprep.subr.mxu0 0.0
  %315 = vmatpush1.msra.mxu0 0.0
  %316 = vmatprep.subr.mxu0 0.0
  %317 = vmatpush1.msra.mxu0 0.0
  %318 = vmatprep.subr.mxu0 0.0
  %319 = vmatpush1.msra.mxu0 0.0
  %320 = vmatprep.subr.mxu0 0.0
  %321 = vmatpush1.msra.mxu0 0.0
  %322 = vmatprep.subr.mxu0 0.0
  %323 = vmatpush1.msra.mxu0 0.0
  %324 = vmatprep.subr.mxu0 0.0
  %325 = vmatpush1.msra.mxu0 0.0
  %326 = vmatprep.subr.mxu0 0.0
  %327 = vmatpush1.msra.mxu0 0.0
  %328 = vmatprep.subr.mxu0 0.0
  %329 = vmatpush1.msra.mxu0 0.0
  %330 = vmatprep.subr.mxu0 0.0
  %331 = vmatpush1.msra.mxu0 0.0
  %332 = vmatprep.subr.mxu0 0.0
  %333 = vmatpush1.msra.mxu0 0.0
  %334 = vmatprep.subr.mxu0 0.0
  %335 = vmatpush1.msra.mxu0 0.0
  %336 = vmatprep.subr.mxu0 0.0
  %337 = vmatpush1.msra.mxu0 0.0
  %338 = vmatprep.mubr.f32.mxu0 0.0
  %339 = vmatmul.mubr.f32.gmra.mrb[0].mxu0 %v272
  %v340 = vpop.f32.mrb[0].mxu0
  %v341 = vadd.f32 0.0, %v340
  %v342 = vpop.f32.mrb[0].mxu0
  %v343 = vadd.f32 0.0, %v342
  %344 = vdwg.mxu0
  %v345 = vadd.f32 %v341, %v32
  %v346 = vtanh.pop %v345
  %v347 = vmul.f32 %v346, 0.5
  %v348 = vadd.f32 %v347, 0.5
  %v349 = vsel %vm243, %v346, %v348
  %v350 = vmul.f32 %v349, 0.0
  %352 = vrot.lane.b32.xlu0 %v349, 64
  %v353 = vpop.permute.xlu0 %352
  %v355 = vmul.f32 %v349, %v353
  %357 = vrot.lane.b32.xlu0 %v355, 32
  %v358 = vpop.permute.xlu0 %357
  %v360 = vadd.f32 %v350, %v358
  %v361 = vtanh.pop %v360
  %363 = vrot.lane.b32.xlu0 %v361, 64
  %v364 = vpop.permute.xlu0 %363
  %v366 = vmul.f32 %v349, %v364
  %v367 = vadd.f32 %v343, %v206
  %v368 = vtanh.pop %v367
  %v369 = vmul.f32 %v368, 0.5
  %v370 = vadd.f32 %v369, 0.5
  %v371 = vsel %vm243, %v368, %v370
  %v372 = vmul.f32 %v371, %v258
  %374 = vrot.lane.b32.xlu0 %v371, 64
  %v375 = vpop.permute.xlu0 %374
  %v377 = vmul.f32 %v371, %v375
  %379 = vrot.lane.b32.xlu0 %v377, 32
  %v380 = vpop.permute.xlu0 %379
  %v382 = vadd.f32 %v372, %v380
  %v383 = vtanh.pop %v382
  %385 = vrot.lane.b32.xlu0 %v383, 64
  %v386 = vpop.permute.xlu0 %385
  %v388 = vmul.f32 %v371, %v386
  %390 = vrot.lane.b32.xlu0 %v388, 32
  %v391 = vpop.permute.xlu0 %390
  %394 = vrot.lane.b32.xlu0 %v366, 64
  %v395 = vpop.permute.xlu0 %394
  %v397 = vsel %vm109, %v391, %v395
  %v399 = vsel %vm270, %v397, 0
  %401 = vmatprep.subr.mxu0 %v12
  %402 = vmatpush1.msra.mxu0 %v11
  %403 = vmatprep.subr.mxu0 %v14
  %404 = vmatpush1.msra.mxu0 %v13
  %405 = vmatprep.subr.mxu0 %v16
  %406 = vmatpush1.msra.mxu0 %v15
  %407 = vmatprep.subr.mxu0 %v18
  %408 = vmatpush1.msra.mxu0 %v17
  %409 = vmatprep.subr.mxu0 %v20
  %410 = vmatpush1.msra.mxu0 %v19
  %411 = vmatprep.subr.mxu0 %v22
  %412 = vmatpush1.msra.mxu0 %v21
  %413 = vmatprep.subr.mxu0 %v24
  %414 = vmatpush1.msra.mxu0 %v23
  %415 = vmatprep.subr.mxu0 %v26
  %416 = vmatpush1.msra.mxu0 %v25
  %417 = vmatprep.subr.mxu0 0.0
  %418 = vmatpush1.msra.mxu0 0.0
  %419 = vmatprep.subr.mxu0 0.0
  %420 = vmatpush1.msra.mxu0 0.0
  %421 = vmatprep.subr.mxu0 0.0
  %422 = vmatpush1.msra.mxu0 0.0
  %423 = vmatprep.subr.mxu0 0.0
  %424 = vmatpush1.msra.mxu0 0.0
  %425 = vmatprep.subr.mxu0 0.0
  %426 = vmatpush1.msra.mxu0 0.0
  %427 = vmatprep.subr.mxu0 0.0
  %428 = vmatpush1.msra.mxu0 0.0
  %429 = vmatprep.subr.mxu0 0.0
  %430 = vmatpush1.msra.mxu0 0.0
  %431 = vmatprep.subr.mxu0 0.0
  %432 = vmatpush1.msra.mxu0 0.0
  %433 = vmatprep.subr.mxu0 0.0
  %434 = vmatpush1.msra.mxu0 0.0
  %435 = vmatprep.subr.mxu0 0.0
  %436 = vmatpush1.msra.mxu0 0.0
  %437 = vmatprep.subr.mxu0 0.0
  %438 = vmatpush1.msra.mxu0 0.0
  %439 = vmatprep.subr.mxu0 0.0
  %440 = vmatpush1.msra.mxu0 0.0
  %441 = vmatprep.subr.mxu0 0.0
  %442 = vmatpush1.msra.mxu0 0.0
  %443 = vmatprep.subr.mxu0 0.0
  %444 = vmatpush1.msra.mxu0 0.0
  %445 = vmatprep.subr.mxu0 0.0
  %446 = vmatpush1.msra.mxu0 0.0
  %447 = vmatprep.subr.mxu0 0.0
  %448 = vmatpush1.msra.mxu0 0.0
  %449 = vmatprep.subr.mxu0 0.0
  %450 = vmatpush1.msra.mxu0 0.0
  %451 = vmatprep.subr.mxu0 0.0
  %452 = vmatpush1.msra.mxu0 0.0
  %453 = vmatprep.subr.mxu0 0.0
  %454 = vmatpush1.msra.mxu0 0.0
  %455 = vmatprep.subr.mxu0 0.0
  %456 = vmatpush1.msra.mxu0 0.0
  %457 = vmatprep.subr.mxu0 0.0
  %458 = vmatpush1.msra.mxu0 0.0
  %459 = vmatprep.subr.mxu0 0.0
  %460 = vmatpush1.msra.mxu0 0.0
  %461 = vmatprep.subr.mxu0 0.0
  %462 = vmatpush1.msra.mxu0 0.0
  %463 = vmatprep.subr.mxu0 0.0
  %464 = vmatpush1.msra.mxu0 0.0
  %465 = vmatprep.mubr.f32.mxu0 0.0
  %466 = vmatmul.mubr.f32.gmra.mrb[0].mxu0 %v399
  %v467 = vpop.f32.mrb[0].mxu0
  %v468 = vadd.f32 0.0, %v467
  %v469 = vpop.f32.mrb[0].mxu0
  %v470 = vadd.f32 0.0, %v469
  %471 = vdwg.mxu0
  %v472 = vadd.f32 %v468, %v32
  %v473 = vtanh.pop %v472
  %v474 = vmul.f32 %v473, 0.5
  %v475 = vadd.f32 %v474, 0.5
  %v476 = vsel %vm243, %v473, %v475
  %v477 = vmul.f32 %v476, %v360
  %479 = vrot.lane.b32.xlu0 %v476, 64
  %v480 = vpop.permute.xlu0 %479
  %v482 = vmul.f32 %v476, %v480
  %484 = vrot.lane.b32.xlu0 %v482, 32
  %v485 = vpop.permute.xlu0 %484
  %v487 = vadd.f32 %v477, %v485
  %v488 = vtanh.pop %v487
  %490 = vrot.lane.b32.xlu0 %v488, 64
  %v491 = vpop.permute.xlu0 %490
  %v493 = vmul.f32 %v476, %v491
  %v494 = vadd.f32 %v470, %v211
  %v495 = vtanh.pop %v494
  %v496 = vmul.f32 %v495, 0.5
  %v497 = vadd.f32 %v496, 0.5
  %v498 = vsel %vm243, %v495, %v497
  %v499 = vmul.f32 %v498, %v382
  %501 = vrot.lane.b32.xlu0 %v498, 64
  %v502 = vpop.permute.xlu0 %501
  %v504 = vmul.f32 %v498, %v502
  %506 = vrot.lane.b32.xlu0 %v504, 32
  %v507 = vpop.permute.xlu0 %506
  %v509 = vadd.f32 %v499, %v507
  %v510 = vtanh.pop %v509
  %512 = vrot.lane.b32.xlu0 %v510, 64
  %v513 = vpop.permute.xlu0 %512
  %v515 = vmul.f32 %v498, %v513
  %517 = vrot.lane.b32.xlu0 %v515, 32
  %v518 = vpop.permute.xlu0 %517
  %521 = vrot.lane.b32.xlu0 %v493, 64
  %v522 = vpop.permute.xlu0 %521
  %v524 = vsel %vm109, %v518, %v522
  %v526 = vsel %vm270, %v524, 0
  %528 = vmatprep.subr.mxu0 %v12
  %529 = vmatpush1.msra.mxu0 %v11
  %530 = vmatprep.subr.mxu0 %v14
  %531 = vmatpush1.msra.mxu0 %v13
  %532 = vmatprep.subr.mxu0 %v16
  %533 = vmatpush1.msra.mxu0 %v15
  %534 = vmatprep.subr.mxu0 %v18
  %535 = vmatpush1.msra.mxu0 %v17
  %536 = vmatprep.subr.mxu0 %v20
  %537 = vmatpush1.msra.mxu0 %v19
  %538 = vmatprep.subr.mxu0 %v22
  %539 = vmatpush1.msra.mxu0 %v21
  %540 = vmatprep.subr.mxu0 %v24
  %541 = vmatpush1.msra.mxu0 %v23
  %542 = vmatprep.subr.mxu0 %v26
  %543 = vmatpush1.msra.mxu0 %v25
  %544 = vmatprep.subr.mxu0 0.0
  %545 = vmatpush1.msra.mxu0 0.0
  %546 = vmatprep.subr.mxu0 0.0
  %547 = vmatpush1.msra.mxu0 0.0
  %548 = vmatprep.subr.mxu0 0.0
  %549 = vmatpush1.msra.mxu0 0.0
  %550 = vmatprep.subr.mxu0 0.0
  %551 = vmatpush1.msra.mxu0 0.0
  %552 = vmatprep.subr.mxu0 0.0
  %553 = vmatpush1.msra.mxu0 0.0
  %554 = vmatprep.subr.mxu0 0.0
  %555 = vmatpush1.msra.mxu0 0.0
  %556 = vmatprep.subr.mxu0 0.0
  %557 = vmatpush1.msra.mxu0 0.0
  %558 = vmatprep.subr.mxu0 0.0
  %559 = vmatpush1.msra.mxu0 0.0
  %560 = vmatprep.subr.mxu0 0.0
  %561 = vmatpush1.msra.mxu0 0.0
  %562 = vmatprep.subr.mxu0 0.0
  %563 = vmatpush1.msra.mxu0 0.0
  %564 = vmatprep.subr.mxu0 0.0
  %565 = vmatpush1.msra.mxu0 0.0
  %566 = vmatprep.subr.mxu0 0.0
  %567 = vmatpush1.msra.mxu0 0.0
  %568 = vmatprep.subr.mxu0 0.0
  %569 = vmatpush1.msra.mxu0 0.0
  %570 = vmatprep.subr.mxu0 0.0
  %571 = vmatpush1.msra.mxu0 0.0
  %572 = vmatprep.subr.mxu0 0.0
  %573 = vmatpush1.msra.mxu0 0.0
  %574 = vmatprep.subr.mxu0 0.0
  %575 = vmatpush1.msra.mxu0 0.0
  %576 = vmatprep.subr.mxu0 0.0
  %577 = vmatpush1.msra.mxu0 0.0
  %578 = vmatprep.subr.mxu0 0.0
  %579 = vmatpush1.msra.mxu0 0.0
  %580 = vmatprep.subr.mxu0 0.0
  %581 = vmatpush1.msra.mxu0 0.0
  %582 = vmatprep.subr.mxu0 0.0
  %583 = vmatpush1.msra.mxu0 0.0
  %584 = vmatprep.subr.mxu0 0.0
  %585 = vmatpush1.msra.mxu0 0.0
  %586 = vmatprep.subr.mxu0 0.0
  %587 = vmatpush1.msra.mxu0 0.0
  %588 = vmatprep.subr.mxu0 0.0
  %589 = vmatpush1.msra.mxu0 0.0
  %590 = vmatprep.subr.mxu0 0.0
  %591 = vmatpush1.msra.mxu0 0.0
  %592 = vmatprep.mubr.f32.mxu0 0.0
  %593 = vmatmul.mubr.f32.gmra.mrb[0].mxu0 %v526
  %v594 = vpop.f32.mrb[0].mxu0
  %v595 = vadd.f32 0.0, %v594
  %v596 = vpop.f32.mrb[0].mxu0
  %v597 = vadd.f32 0.0, %v596
  %598 = vdwg.mxu0
  %v599 = vadd.f32 %v595, %v32
  %v600 = vtanh.pop %v599
  %v601 = vmul.f32 %v600, 0.5
  %v602 = vadd.f32 %v601, 0.5
  %v603 = vsel %vm243, %v600, %v602
  %v604 = vmul.f32 %v603, %v487
  %606 = vrot.lane.b32.xlu0 %v603, 64
  %v607 = vpop.permute.xlu0 %606
  %v609 = vmul.f32 %v603, %v607
  %611 = vrot.lane.b32.xlu0 %v609, 32
  %v612 = vpop.permute.xlu0 %611
  %v614 = vadd.f32 %v604, %v612
  %v615 = vtanh.pop %v614
  %617 = vrot.lane.b32.xlu0 %v615, 64
  %v618 = vpop.permute.xlu0 %617
  %v620 = vmul.f32 %v603, %v618
  %v621 = vadd.f32 %v597, %v216
  %v622 = vtanh.pop %v621
  %v623 = vmul.f32 %v622, 0.5
  %v624 = vadd.f32 %v623, 0.5
  %v625 = vsel %vm243, %v622, %v624
  %v626 = vmul.f32 %v625, %v509
  %628 = vrot.lane.b32.xlu0 %v625, 64
  %v629 = vpop.permute.xlu0 %628
  %v631 = vmul.f32 %v625, %v629
  %633 = vrot.lane.b32.xlu0 %v631, 32
  %v634 = vpop.permute.xlu0 %633
  %v636 = vadd.f32 %v626, %v634
  %v637 = vtanh.pop %v636
  %639 = vrot.lane.b32.xlu0 %v637, 64
  %v640 = vpop.permute.xlu0 %639
  %v642 = vmul.f32 %v625, %v640
  %644 = vrot.lane.b32.xlu0 %v642, 32
  %v645 = vpop.permute.xlu0 %644
  %648 = vrot.lane.b32.xlu0 %v620, 64
  %v649 = vpop.permute.xlu0 %648
  %v651 = vsel %vm109, %v645, %v649
  %v653 = vsel %vm270, %v651, 0
  %655 = vmatprep.subr.mxu0 %v12
  %656 = vmatpush1.msra.mxu0 %v11
  %657 = vmatprep.subr.mxu0 %v14
  %658 = vmatpush1.msra.mxu0 %v13
  %659 = vmatprep.subr.mxu0 %v16
  %660 = vmatpush1.msra.mxu0 %v15
  %661 = vmatprep.subr.mxu0 %v18
  %662 = vmatpush1.msra.mxu0 %v17
  %663 = vmatprep.subr.mxu0 %v20
  %664 = vmatpush1.msra.mxu0 %v19
  %665 = vmatprep.subr.mxu0 %v22
  %666 = vmatpush1.msra.mxu0 %v21
  %667 = vmatprep.subr.mxu0 %v24
  %668 = vmatpush1.msra.mxu0 %v23
  %669 = vmatprep.subr.mxu0 %v26
  %670 = vmatpush1.msra.mxu0 %v25
  %671 = vmatprep.subr.mxu0 0.0
  %672 = vmatpush1.msra.mxu0 0.0
  %673 = vmatprep.subr.mxu0 0.0
  %674 = vmatpush1.msra.mxu0 0.0
  %675 = vmatprep.subr.mxu0 0.0
  %676 = vmatpush1.msra.mxu0 0.0
  %677 = vmatprep.subr.mxu0 0.0
  %678 = vmatpush1.msra.mxu0 0.0
  %679 = vmatprep.subr.mxu0 0.0
  %680 = vmatpush1.msra.mxu0 0.0
  %681 = vmatprep.subr.mxu0 0.0
  %682 = vmatpush1.msra.mxu0 0.0
  %683 = vmatprep.subr.mxu0 0.0
  %684 = vmatpush1.msra.mxu0 0.0
  %685 = vmatprep.subr.mxu0 0.0
  %686 = vmatpush1.msra.mxu0 0.0
  %687 = vmatprep.subr.mxu0 0.0
  %688 = vmatpush1.msra.mxu0 0.0
  %689 = vmatprep.subr.mxu0 0.0
  %690 = vmatpush1.msra.mxu0 0.0
  %691 = vmatprep.subr.mxu0 0.0
  %692 = vmatpush1.msra.mxu0 0.0
  %693 = vmatprep.subr.mxu0 0.0
  %694 = vmatpush1.msra.mxu0 0.0
  %695 = vmatprep.subr.mxu0 0.0
  %696 = vmatpush1.msra.mxu0 0.0
  %697 = vmatprep.subr.mxu0 0.0
  %698 = vmatpush1.msra.mxu0 0.0
  %699 = vmatprep.subr.mxu0 0.0
  %700 = vmatpush1.msra.mxu0 0.0
  %701 = vmatprep.subr.mxu0 0.0
  %702 = vmatpush1.msra.mxu0 0.0
  %703 = vmatprep.subr.mxu0 0.0
  %704 = vmatpush1.msra.mxu0 0.0
  %705 = vmatprep.subr.mxu0 0.0
  %706 = vmatpush1.msra.mxu0 0.0
  %707 = vmatprep.subr.mxu0 0.0
  %708 = vmatpush1.msra.mxu0 0.0
  %709 = vmatprep.subr.mxu0 0.0
  %710 = vmatpush1.msra.mxu0 0.0
  %711 = vmatprep.subr.mxu0 0.0
  %712 = vmatpush1.msra.mxu0 0.0
  %713 = vmatprep.subr.mxu0 0.0
  %714 = vmatpush1.msra.mxu0 0.0
  %715 = vmatprep.subr.mxu0 0.0
  %716 = vmatpush1.msra.mxu0 0.0
  %717 = vmatprep.subr.mxu0 0.0
  %718 = vmatpush1.msra.mxu0 0.0
  %719 = vmatprep.mubr.f32.mxu0 0.0
  %720 = vmatmul.mubr.f32.gmra.mrb[0].mxu0 %v653
  %v721 = vpop.f32.mrb[0].mxu0
  %v722 = vadd.f32 0.0, %v721
  %v723 = vpop.f32.mrb[0].mxu0
  %v724 = vadd.f32 0.0, %v723
  %725 = vdwg.mxu0
  %v726 = vadd.f32 %v722, %v32
  %v727 = vtanh.pop %v726
  %v728 = vmul.f32 %v727, 0.5
  %v729 = vadd.f32 %v728, 0.5
  %v730 = vsel %vm243, %v727, %v729
  %v731 = vmul.f32 %v730, %v614
  %733 = vrot.lane.b32.xlu0 %v730, 64
  %v734 = vpop.permute.xlu0 %733
  %v736 = vmul.f32 %v730, %v734
  %738 = vrot.lane.b32.xlu0 %v736, 32
  %v739 = vpop.permute.xlu0 %738
  %v741 = vadd.f32 %v731, %v739
  %v742 = vtanh.pop %v741
  %744 = vrot.lane.b32.xlu0 %v742, 64
  %v745 = vpop.permute.xlu0 %744
  %v747 = vmul.f32 %v730, %v745
  %v748 = vadd.f32 %v724, %v221
  %v749 = vtanh.pop %v748
  %v750 = vmul.f32 %v749, 0.5
  %v751 = vadd.f32 %v750, 0.5
  %v752 = vsel %vm243, %v749, %v751
  %v753 = vmul.f32 %v752, %v636
  %755 = vrot.lane.b32.xlu0 %v752, 64
  %v756 = vpop.permute.xlu0 %755
  %v758 = vmul.f32 %v752, %v756
  %760 = vrot.lane.b32.xlu0 %v758, 32
  %v761 = vpop.permute.xlu0 %760
  %v763 = vadd.f32 %v753, %v761
  %v764 = vtanh.pop %v763
  %766 = vrot.lane.b32.xlu0 %v764, 64
  %v767 = vpop.permute.xlu0 %766
  %v769 = vmul.f32 %v752, %v767
  %771 = vrot.lane.b32.xlu0 %v769, 32
  %v772 = vpop.permute.xlu0 %771
  %775 = vrot.lane.b32.xlu0 %v747, 64
  %v776 = vpop.permute.xlu0 %775
  %v778 = vsel %vm109, %v772, %v776
  %v780 = vsel %vm270, %v778, 0
  %782 = vmatprep.subr.mxu0 %v12
  %783 = vmatpush1.msra.mxu0 %v11
  %784 = vmatprep.subr.mxu0 %v14
  %785 = vmatpush1.msra.mxu0 %v13
  %786 = vmatprep.subr.mxu0 %v16
  %787 = vmatpush1.msra.mxu0 %v15
  %788 = vmatprep.subr.mxu0 %v18
  %789 = vmatpush1.msra.mxu0 %v17
  %790 = vmatprep.subr.mxu0 %v20
  %791 = vmatpush1.msra.mxu0 %v19
  %792 = vmatprep.subr.mxu0 %v22
  %793 = vmatpush1.msra.mxu0 %v21
  %794 = vmatprep.subr.mxu0 %v24
  %795 = vmatpush1.msra.mxu0 %v23
  %796 = vmatprep.subr.mxu0 %v26
  %797 = vmatpush1.msra.mxu0 %v25
  %798 = vmatprep.subr.mxu0 0.0
  %799 = vmatpush1.msra.mxu0 0.0
  %800 = vmatprep.subr.mxu0 0.0
  %801 = vmatpush1.msra.mxu0 0.0
  %802 = vmatprep.subr.mxu0 0.0
  %803 = vmatpush1.msra.mxu0 0.0
  %804 = vmatprep.subr.mxu0 0.0
  %805 = vmatpush1.msra.mxu0 0.0
  %806 = vmatprep.subr.mxu0 0.0
  %807 = vmatpush1.msra.mxu0 0.0
  %808 = vmatprep.subr.mxu0 0.0
  %809 = vmatpush1.msra.mxu0 0.0
  %810 = vmatprep.subr.mxu0 0.0
  %811 = vmatpush1.msra.mxu0 0.0
  %812 = vmatprep.subr.mxu0 0.0
  %813 = vmatpush1.msra.mxu0 0.0
  %814 = vmatprep.subr.mxu0 0.0
  %815 = vmatpush1.msra.mxu0 0.0
  %816 = vmatprep.subr.mxu0 0.0
  %817 = vmatpush1.msra.mxu0 0.0
  %818 = vmatprep.subr.mxu0 0.0
  %819 = vmatpush1.msra.mxu0 0.0
  %820 = vmatprep.subr.mxu0 0.0
  %821 = vmatpush1.msra.mxu0 0.0
  %822 = vmatprep.subr.mxu0 0.0
  %823 = vmatpush1.msra.mxu0 0.0
  %824 = vmatprep.subr.mxu0 0.0
  %825 = vmatpush1.msra.mxu0 0.0
  %826 = vmatprep.subr.mxu0 0.0
  %827 = vmatpush1.msra.mxu0 0.0
  %828 = vmatprep.subr.mxu0 0.0
  %829 = vmatpush1.msra.mxu0 0.0
  %830 = vmatprep.subr.mxu0 0.0
  %831 = vmatpush1.msra.mxu0 0.0
  %832 = vmatprep.subr.mxu0 0.0
  %833 = vmatpush1.msra.mxu0 0.0
  %834 = vmatprep.subr.mxu0 0.0
  %835 = vmatpush1.msra.mxu0 0.0
  %836 = vmatprep.subr.mxu0 0.0
  %837 = vmatpush1.msra.mxu0 0.0
  %838 = vmatprep.subr.mxu0 0.0
  %839 = vmatpush1.msra.mxu0 0.0
  %840 = vmatprep.subr.mxu0 0.0
  %841 = vmatpush1.msra.mxu0 0.0
  %842 = vmatprep.subr.mxu0 0.0
  %843 = vmatpush1.msra.mxu0 0.0
  %844 = vmatprep.subr.mxu0 0.0
  %845 = vmatpush1.msra.mxu0 0.0
  %846 = vmatprep.mubr.f32.mxu0 0.0
  %847 = vmatmul.mubr.f32.gmra.mrb[0].mxu0 %v780
  %v848 = vpop.f32.mrb[0].mxu0
  %v849 = vadd.f32 0.0, %v848
  %v850 = vpop.f32.mrb[0].mxu0
  %v851 = vadd.f32 0.0, %v850
  %852 = vdwg.mxu0
  %v853 = vadd.f32 %v849, %v32
  %v854 = vtanh.pop %v853
  %v855 = vmul.f32 %v854, 0.5
  %v856 = vadd.f32 %v855, 0.5
  %v857 = vsel %vm243, %v854, %v856
  %v858 = vmul.f32 %v857, %v741
  %860 = vrot.lane.b32.xlu0 %v857, 64
  %v861 = vpop.permute.xlu0 %860
  %v863 = vmul.f32 %v857, %v861
  %865 = vrot.lane.b32.xlu0 %v863, 32
  %v866 = vpop.permute.xlu0 %865
  %v868 = vadd.f32 %v858, %v866
  %v869 = vtanh.pop %v868
  %871 = vrot.lane.b32.xlu0 %v869, 64
  %v872 = vpop.permute.xlu0 %871
  %v874 = vmul.f32 %v857, %v872
  %v875 = vadd.f32 %v851, %v226
  %v876 = vtanh.pop %v875
  %v877 = vmul.f32 %v876, 0.5
  %v878 = vadd.f32 %v877, 0.5
  %v879 = vsel %vm243, %v876, %v878
  %v880 = vmul.f32 %v879, %v763
  %882 = vrot.lane.b32.xlu0 %v879, 64
  %v883 = vpop.permute.xlu0 %882
  %v885 = vmul.f32 %v879, %v883
  %887 = vrot.lane.b32.xlu0 %v885, 32
  %v888 = vpop.permute.xlu0 %887
  %v890 = vadd.f32 %v880, %v888
  %v891 = vtanh.pop %v890
  %893 = vrot.lane.b32.xlu0 %v891, 64
  %v894 = vpop.permute.xlu0 %893
  %v896 = vmul.f32 %v879, %v894
  %898 = vrot.lane.b32.xlu0 %v896, 32
  %v899 = vpop.permute.xlu0 %898
  %902 = vrot.lane.b32.xlu0 %v874, 64
  %v903 = vpop.permute.xlu0 %902
  %v905 = vsel %vm109, %v899, %v903
  %v907 = vsel %vm270, %v905, 0
  %909 = vmatprep.subr.mxu0 %v12
  %910 = vmatpush1.msra.mxu0 %v11
  %911 = vmatprep.subr.mxu0 %v14
  %912 = vmatpush1.msra.mxu0 %v13
  %913 = vmatprep.subr.mxu0 %v16
  %914 = vmatpush1.msra.mxu0 %v15
  %915 = vmatprep.subr.mxu0 %v18
  %916 = vmatpush1.msra.mxu0 %v17
  %917 = vmatprep.subr.mxu0 %v20
  %918 = vmatpush1.msra.mxu0 %v19
  %919 = vmatprep.subr.mxu0 %v22
  %920 = vmatpush1.msra.mxu0 %v21
  %921 = vmatprep.subr.mxu0 %v24
  %922 = vmatpush1.msra.mxu0 %v23
  %923 = vmatprep.subr.mxu0 %v26
  %924 = vmatpush1.msra.mxu0 %v25
  %925 = vmatprep.subr.mxu0 0.0
  %926 = vmatpush1.msra.mxu0 0.0
  %927 = vmatprep.subr.mxu0 0.0
  %928 = vmatpush1.msra.mxu0 0.0
  %929 = vmatprep.subr.mxu0 0.0
  %930 = vmatpush1.msra.mxu0 0.0
  %931 = vmatprep.subr.mxu0 0.0
  %932 = vmatpush1.msra.mxu0 0.0
  %933 = vmatprep.subr.mxu0 0.0
  %934 = vmatpush1.msra.mxu0 0.0
  %935 = vmatprep.subr.mxu0 0.0
  %936 = vmatpush1.msra.mxu0 0.0
  %937 = vmatprep.subr.mxu0 0.0
  %938 = vmatpush1.msra.mxu0 0.0
  %939 = vmatprep.subr.mxu0 0.0
  %940 = vmatpush1.msra.mxu0 0.0
  %941 = vmatprep.subr.mxu0 0.0
  %942 = vmatpush1.msra.mxu0 0.0
  %943 = vmatprep.subr.mxu0 0.0
  %944 = vmatpush1.msra.mxu0 0.0
  %945 = vmatprep.subr.mxu0 0.0
  %946 = vmatpush1.msra.mxu0 0.0
  %947 = vmatprep.subr.mxu0 0.0
  %948 = vmatpush1.msra.mxu0 0.0
  %949 = vmatprep.subr.mxu0 0.0
  %950 = vmatpush1.msra.mxu0 0.0
  %951 = vmatprep.subr.mxu0 0.0
  %952 = vmatpush1.msra.mxu0 0.0
  %953 = vmatprep.subr.mxu0 0.0
  %954 = vmatpush1.msra.mxu0 0.0
  %955 = vmatprep.subr.mxu0 0.0
  %956 = vmatpush1.msra.mxu0 0.0
  %957 = vmatprep.subr.mxu0 0.0
  %958 = vmatpush1.msra.mxu0 0.0
  %959 = vmatprep.subr.mxu0 0.0
  %960 = vmatpush1.msra.mxu0 0.0
  %961 = vmatprep.subr.mxu0 0.0
  %962 = vmatpush1.msra.mxu0 0.0
  %963 = vmatprep.subr.mxu0 0.0
  %964 = vmatpush1.msra.mxu0 0.0
  %965 = vmatprep.subr.mxu0 0.0
  %966 = vmatpush1.msra.mxu0 0.0
  %967 = vmatprep.subr.mxu0 0.0
  %968 = vmatpush1.msra.mxu0 0.0
  %969 = vmatprep.subr.mxu0 0.0
  %970 = vmatpush1.msra.mxu0 0.0
  %971 = vmatprep.subr.mxu0 0.0
  %972 = vmatpush1.msra.mxu0 0.0
  %973 = vmatprep.mubr.f32.mxu0 0.0
  %974 = vmatmul.mubr.f32.gmra.mrb[0].mxu0 %v907
  %v975 = vpop.f32.mrb[0].mxu0
  %v976 = vadd.f32 0.0, %v975
  %v977 = vpop.f32.mrb[0].mxu0
  %v978 = vadd.f32 0.0, %v977
  %979 = vdwg.mxu0
  %v980 = vadd.f32 %v976, %v32
  %v981 = vtanh.pop %v980
  %v982 = vmul.f32 %v981, 0.5
  %v983 = vadd.f32 %v982, 0.5
  %v984 = vsel %vm243, %v981, %v983
  %v985 = vmul.f32 %v984, %v868
  %987 = vrot.lane.b32.xlu0 %v984, 64
  %v988 = vpop.permute.xlu0 %987
  %v990 = vmul.f32 %v984, %v988
  %992 = vrot.lane.b32.xlu0 %v990, 32
  %v993 = vpop.permute.xlu0 %992
  %v995 = vadd.f32 %v985, %v993
  %v996 = vtanh.pop %v995
  %998 = vrot.lane.b32.xlu0 %v996, 64
  %v999 = vpop.permute.xlu0 %998
  %v1001 = vmul.f32 %v984, %v999
  %v1002 = vadd.f32 %v978, %v231
  %v1003 = vtanh.pop %v1002
  %v1004 = vmul.f32 %v1003, 0.5
  %v1005 = vadd.f32 %v1004, 0.5
  %v1006 = vsel %vm243, %v1003, %v1005
  %v1007 = vmul.f32 %v1006, %v890
  %1009 = vrot.lane.b32.xlu0 %v1006, 64
  %v1010 = vpop.permute.xlu0 %1009
  %v1012 = vmul.f32 %v1006, %v1010
  %1014 = vrot.lane.b32.xlu0 %v1012, 32
  %v1015 = vpop.permute.xlu0 %1014
  %v1017 = vadd.f32 %v1007, %v1015
  %v1018 = vtanh.pop %v1017
  %1020 = vrot.lane.b32.xlu0 %v1018, 64
  %v1021 = vpop.permute.xlu0 %1020
  %v1023 = vmul.f32 %v1006, %v1021
  %1025 = vrot.lane.b32.xlu0 %v1023, 32
  %v1026 = vpop.permute.xlu0 %1025
  %1029 = vrot.lane.b32.xlu0 %v1001, 64
  %v1030 = vpop.permute.xlu0 %1029
  %v1032 = vsel %vm109, %v1026, %v1030
  %v1034 = vsel %vm270, %v1032, 0
  %1036 = vmatprep.subr.mxu0 %v12
  %1037 = vmatpush1.msra.mxu0 %v11
  %1038 = vmatprep.subr.mxu0 %v14
  %1039 = vmatpush1.msra.mxu0 %v13
  %1040 = vmatprep.subr.mxu0 %v16
  %1041 = vmatpush1.msra.mxu0 %v15
  %1042 = vmatprep.subr.mxu0 %v18
  %1043 = vmatpush1.msra.mxu0 %v17
  %1044 = vmatprep.subr.mxu0 %v20
  %1045 = vmatpush1.msra.mxu0 %v19
  %1046 = vmatprep.subr.mxu0 %v22
  %1047 = vmatpush1.msra.mxu0 %v21
  %1048 = vmatprep.subr.mxu0 %v24
  %1049 = vmatpush1.msra.mxu0 %v23
  %1050 = vmatprep.subr.mxu0 %v26
  %1051 = vmatpush1.msra.mxu0 %v25
  %1052 = vmatprep.subr.mxu0 0.0
  %1053 = vmatpush1.msra.mxu0 0.0
  %1054 = vmatprep.subr.mxu0 0.0
  %1055 = vmatpush1.msra.mxu0 0.0
  %1056 = vmatprep.subr.mxu0 0.0
  %1057 = vmatpush1.msra.mxu0 0.0
  %1058 = vmatprep.subr.mxu0 0.0
  %1059 = vmatpush1.msra.mxu0 0.0
  %1060 = vmatprep.subr.mxu0 0.0
  %1061 = vmatpush1.msra.mxu0 0.0
  %1062 = vmatprep.subr.mxu0 0.0
  %1063 = vmatpush1.msra.mxu0 0.0
  %1064 = vmatprep.subr.mxu0 0.0
  %1065 = vmatpush1.msra.mxu0 0.0
  %1066 = vmatprep.subr.mxu0 0.0
  %1067 = vmatpush1.msra.mxu0 0.0
  %1068 = vmatprep.subr.mxu0 0.0
  %1069 = vmatpush1.msra.mxu0 0.0
  %1070 = vmatprep.subr.mxu0 0.0
  %1071 = vmatpush1.msra.mxu0 0.0
  %1072 = vmatprep.subr.mxu0 0.0
  %1073 = vmatpush1.msra.mxu0 0.0
  %1074 = vmatprep.subr.mxu0 0.0
  %1075 = vmatpush1.msra.mxu0 0.0
  %1076 = vmatprep.subr.mxu0 0.0
  %1077 = vmatpush1.msra.mxu0 0.0
  %1078 = vmatprep.subr.mxu0 0.0
  %1079 = vmatpush1.msra.mxu0 0.0
  %1080 = vmatprep.subr.mxu0 0.0
  %1081 = vmatpush1.msra.mxu0 0.0
  %1082 = vmatprep.subr.mxu0 0.0
  %1083 = vmatpush1.msra.mxu0 0.0
  %1084 = vmatprep.subr.mxu0 0.0
  %1085 = vmatpush1.msra.mxu0 0.0
  %1086 = vmatprep.subr.mxu0 0.0
  %1087 = vmatpush1.msra.mxu0 0.0
  %1088 = vmatprep.subr.mxu0 0.0
  %1089 = vmatpush1.msra.mxu0 0.0
  %1090 = vmatprep.subr.mxu0 0.0
  %1091 = vmatpush1.msra.mxu0 0.0
  %1092 = vmatprep.subr.mxu0 0.0
  %1093 = vmatpush1.msra.mxu0 0.0
  %1094 = vmatprep.subr.mxu0 0.0
  %1095 = vmatpush1.msra.mxu0 0.0
  %1096 = vmatprep.subr.mxu0 0.0
  %1097 = vmatpush1.msra.mxu0 0.0
  %1098 = vmatprep.subr.mxu0 0.0
  %1099 = vmatpush1.msra.mxu0 0.0
  %1100 = vmatprep.mubr.f32.mxu0 0.0
  %1101 = vmatmul.mubr.f32.gmra.mrb[0].mxu0 %v1034
  %v1102 = vpop.f32.mrb[0].mxu0
  %v1103 = vadd.f32 0.0, %v1102
  %v1104 = vpop.f32.mrb[0].mxu0
  %v1105 = vadd.f32 0.0, %v1104
  %1106 = vdwg.mxu0
  %v1107 = vadd.f32 %v1103, %v32
  %v1108 = vtanh.pop %v1107
  %v1109 = vmul.f32 %v1108, 0.5
  %v1110 = vadd.f32 %v1109, 0.5
  %v1111 = vsel %vm243, %v1108, %v1110
  %v1112 = vmul.f32 %v1111, %v995
  %1114 = vrot.lane.b32.xlu0 %v1111, 64
  %v1115 = vpop.permute.xlu0 %1114
  %v1117 = vmul.f32 %v1111, %v1115
  %1119 = vrot.lane.b32.xlu0 %v1117, 32
  %v1120 = vpop.permute.xlu0 %1119
  %v1122 = vadd.f32 %v1112, %v1120
  %v1123 = vtanh.pop %v1122
  %1125 = vrot.lane.b32.xlu0 %v1123, 64
  %v1126 = vpop.permute.xlu0 %1125
  %v1128 = vmul.f32 %v1111, %v1126
  %v1129 = vadd.f32 %v1105, %v236
  %v1130 = vtanh.pop %v1129
  %v1131 = vmul.f32 %v1130, 0.5
  %v1132 = vadd.f32 %v1131, 0.5
  %v1133 = vsel %vm243, %v1130, %v1132
  %v1134 = vmul.f32 %v1133, %v1017
  %1136 = vrot.lane.b32.xlu0 %v1133, 64
  %v1137 = vpop.permute.xlu0 %1136
  %v1139 = vmul.f32 %v1133, %v1137
  %1141 = vrot.lane.b32.xlu0 %v1139, 32
  %v1142 = vpop.permute.xlu0 %1141
  %v1144 = vadd.f32 %v1134, %v1142
  %v1145 = vtanh.pop %v1144
  %1147 = vrot.lane.b32.xlu0 %v1145, 64
  %v1148 = vpop.permute.xlu0 %1147
  %v1150 = vmul.f32 %v1133, %v1148
  %1152 = vrot.lane.b32.xlu0 %v1150, 32
  %v1153 = vpop.permute.xlu0 %1152
  %1156 = vrot.lane.b32.xlu0 %v1128, 64
  %v1157 = vpop.permute.xlu0 %1156
  %v1159 = vsel %vm109, %v1153, %v1157
  %v1161 = vsel %vm270, %v1159, 0
  %1163 = vmatprep.subr.mxu0 %v12
  %1164 = vmatpush1.msra.mxu0 %v11
  %1165 = vmatprep.subr.mxu0 %v14
  %1166 = vmatpush1.msra.mxu0 %v13
  %1167 = vmatprep.subr.mxu0 %v16
  %1168 = vmatpush1.msra.mxu0 %v15
  %1169 = vmatprep.subr.mxu0 %v18
  %1170 = vmatpush1.msra.mxu0 %v17
  %1171 = vmatprep.subr.mxu0 %v20
  %1172 = vmatpush1.msra.mxu0 %v19
  %1173 = vmatprep.subr.mxu0 %v22
  %1174 = vmatpush1.msra.mxu0 %v21
  %1175 = vmatprep.subr.mxu0 %v24
  %1176 = vmatpush1.msra.mxu0 %v23
  %1177 = vmatprep.subr.mxu0 %v26
  %1178 = vmatpush1.msra.mxu0 %v25
  %1179 = vmatprep.subr.mxu0 0.0
  %1180 = vmatpush1.msra.mxu0 0.0
  %1181 = vmatprep.subr.mxu0 0.0
  %1182 = vmatpush1.msra.mxu0 0.0
  %1183 = vmatprep.subr.mxu0 0.0
  %1184 = vmatpush1.msra.mxu0 0.0
  %1185 = vmatprep.subr.mxu0 0.0
  %1186 = vmatpush1.msra.mxu0 0.0
  %1187 = vmatprep.subr.mxu0 0.0
  %1188 = vmatpush1.msra.mxu0 0.0
  %1189 = vmatprep.subr.mxu0 0.0
  %1190 = vmatpush1.msra.mxu0 0.0
  %1191 = vmatprep.subr.mxu0 0.0
  %1192 = vmatpush1.msra.mxu0 0.0
  %1193 = vmatprep.subr.mxu0 0.0
  %1194 = vmatpush1.msra.mxu0 0.0
  %1195 = vmatprep.subr.mxu0 0.0
  %1196 = vmatpush1.msra.mxu0 0.0
  %1197 = vmatprep.subr.mxu0 0.0
  %1198 = vmatpush1.msra.mxu0 0.0
  %1199 = vmatprep.subr.mxu0 0.0
  %1200 = vmatpush1.msra.mxu0 0.0
  %1201 = vmatprep.subr.mxu0 0.0
  %1202 = vmatpush1.msra.mxu0 0.0
  %1203 = vmatprep.subr.mxu0 0.0
  %1204 = vmatpush1.msra.mxu0 0.0
  %1205 = vmatprep.subr.mxu0 0.0
  %1206 = vmatpush1.msra.mxu0 0.0
  %1207 = vmatprep.subr.mxu0 0.0
  %1208 = vmatpush1.msra.mxu0 0.0
  %1209 = vmatprep.subr.mxu0 0.0
  %1210 = vmatpush1.msra.mxu0 0.0
  %1211 = vmatprep.subr.mxu0 0.0
  %1212 = vmatpush1.msra.mxu0 0.0
  %1213 = vmatprep.subr.mxu0 0.0
  %1214 = vmatpush1.msra.mxu0 0.0
  %1215 = vmatprep.subr.mxu0 0.0
  %1216 = vmatpush1.msra.mxu0 0.0
  %1217 = vmatprep.subr.mxu0 0.0
  %1218 = vmatpush1.msra.mxu0 0.0
  %1219 = vmatprep.subr.mxu0 0.0
  %1220 = vmatpush1.msra.mxu0 0.0
  %1221 = vmatprep.subr.mxu0 0.0
  %1222 = vmatpush1.msra.mxu0 0.0
  %1223 = vmatprep.subr.mxu0 0.0
  %1224 = vmatpush1.msra.mxu0 0.0
  %1225 = vmatprep.subr.mxu0 0.0
  %1226 = vmatpush1.msra.mxu0 0.0
  %1227 = vmatprep.mubr.f32.mxu0 0.0
  %1228 = vmatmul.mubr.f32.gmra.mrb[0].mxu0 %v1161
  %v1229 = vpop.f32.mrb[0].mxu0
  %v1230 = vadd.f32 0.0, %v1229
  %v1231 = vpop.f32.mrb[0].mxu0
  %1232 = vdwg.mxu0
  %v1233 = vadd.f32 %v1230, %v32
  %v1234 = vtanh.pop %v1233
  %v1235 = vmul.f32 %v1234, 0.5
  %v1236 = vadd.f32 %v1235, 0.5
  %v1237 = vsel %vm243, %v1234, %v1236
  %v1238 = vmul.f32 %v1237, %v1122
  %1240 = vrot.lane.b32.xlu0 %v1237, 64
  %v1241 = vpop.permute.xlu0 %1240
  %v1243 = vmul.f32 %v1237, %v1241
  %1245 = vrot.lane.b32.xlu0 %v1243, 32
  %v1246 = vpop.permute.xlu0 %1245
  %v1248 = vadd.f32 %v1238, %v1246
  %v1249 = vtanh.pop %v1248
  %1251 = vrot.lane.b32.xlu0 %v1249, 64
  %v1252 = vpop.permute.xlu0 %1251
  %v1254 = vmul.f32 %v1237, %v1252
  %1256 = vrot.lane.b32.xlu0 %v1254, 64
  %v1257 = vpop.permute.xlu0 %1256
  %v1259 = vsel %vm109, %v1153, %v1257
  %v1260 = vmul.f32 %v1259, %v35
  %v1261 = vsel %vm270, %v1260, 0.0
  %1262 = vadd.xlane.f32.xlu0 %v1261
  %v1263 = vpop.xlane.xlu0 %1262
  %v1264 = vadd.f32 %v1263, %v36
  %vm1265 = vcmask 7168
  %1266 = vst.msk [vmem:[%s2] sm:$0xff] %vm1265, %v1264
  // Predicated region
  $region10: #{lstm_model_forward.1} parent=0 // pred_check
    _
  $region11: #{lstm_model_forward.1} parent=0 // pred_check_branch
    %1268 = sbr.rel (0) target = $region13
  $region12: #{lstm_model_forward.1} parent=0 // pred_region
    _
  $region13: #{lstm_model_forward.1} parent=0 // pred_fallthru
    _
  // Predicated region
  $region14: #{lstm_model_forward.1} parent=0 // pred_check
    _
  $region15: #{lstm_model_forward.1} parent=0 // pred_check_branch
    %1270 = sbr.rel (0) target = $region17
  $region16: #{lstm_model_forward.1} parent=0 // pred_region
    _
  $region17: #{lstm_model_forward.1} parent=0 // pred_fallthru
    _

</llo_original>
